<compile_context>
chip_gen: v6e
topology: v6e:2x2x1
jax: 0.10.0
libtpu: 0.0.40
codegen_flags: <defaults>
</compile_context>

<pallas_src>
import functools

import jax
import jax.numpy as jnp
import numpy as np
from jax import lax
from jax.experimental import pallas as pl
from jax.experimental.pallas import tpu as pltpu

MATMUL_DTYPE = jnp.float32     # flip to jnp.bfloat16 on v6e/v7x (tol ~1e-2)
ONEHOT_DTYPE = jnp.bfloat16    # 0/1 one-hots are exact in bf16
LANE = 128
NODE_BLOCK_TARGET = 512        # caps the [TE, NBLK] one-hot working set


def _round_up(n, m):
    return ((n + m - 1) // m) * m


def _vmem_capacity_bytes():
    try:
        return int(pltpu.get_tpu_info().vmem_capacity_bytes)
    except Exception:
        return 64 * 1024 * 1024                      # conservative fallback


def _vmem_limit_bytes():
    # ~75% of physical VMEM, capped at 100 MiB: v7x (64 MiB) -> 48 MiB,
    # v5e/v6e (128 MiB) -> 96 MiB.
    return min(100 * 1024 * 1024, (_vmem_capacity_bytes() * 3) // 4)


def default_edge_tile():
    # 512+ rows on v5e/v6e (fills the MXU, amortizes grid-step overhead);
    # 256 on v7x where VMEM is half the size.
    return 512 if _vmem_capacity_bytes() >= 96 * 1024 * 1024 else 256


def _compiler_params():
    return pltpu.CompilerParams(
        dimension_semantics=("arbitrary",),          # edge axis is a reduction
        vmem_limit_bytes=_vmem_limit_bytes())


def _mm(a, b):
    """MXU matmul with f32 accumulation; operands cast to MATMUL_DTYPE."""
    return jnp.dot(a.astype(MATMUL_DTYPE), b.astype(MATMUL_DTYPE),
                   preferred_element_type=jnp.float32)


# ---------------------------------------------------------------------------
# Shared per-edge-tile body.
#   tile 0   : xa = x @ W1a + b1, xb = x @ W1b (node-sized), zero accumulator
#   per tile : node-blocked one-hot gather -> relu -> (TE,Hp)x(Hp,Hp) matmul
#              -> node-blocked transposed one-hot scatter-add into acc_ref
# ---------------------------------------------------------------------------
def _edge_tile_body(src_c_ref, dst_c_ref, dst_r_ref, x_ref, w1a_ref, w1b_ref,
                    b1_ref, w2_ref, b2_ref, xa_ref, xb_ref, acc_ref, *,
                    node_block):
    t = pl.program_id(0)
    n_nodes = acc_ref.shape[0]          # padded node count (multiple of block)
    hp = acc_ref.shape[1]
    te = src_c_ref.shape[1]
    n_blocks = n_nodes // node_block

    @pl.when(t == 0)
    def _init():
        x = x_ref[...]
        xa_ref[...] = _mm(x, w1a_ref[...]) + b1_ref[...]     # b1 folded in
        xb_ref[...] = _mm(x, w1b_ref[...])
        acc_ref[...] = jnp.zeros_like(acc_ref)

    src_c = src_c_ref[0]                # [TE, 1] int32  (x_j / source)
    dst_c = dst_c_ref[0]                # [TE, 1] int32  (x_i / target)
    dst_r = dst_r_ref[0]                # [1, TE] int32  (scatter targets)

    # ---- Gather: h = xa[dst] + xb[src], blocked over the node dimension. ----
    blk_iota = lax.broadcasted_iota(jnp.int32, (te, node_block), 1)

    def gather_block(nb, h):
        off = pl.multiple_of(nb * node_block, node_block)
        ids = blk_iota + off
        # Padded edges carry index == n_nodes, which never matches any block.
        oh_dst = (ids == dst_c).astype(ONEHOT_DTYPE)          # [TE, NBLK]
        oh_src = (ids == src_c).astype(ONEHOT_DTYPE)
        xa_blk = xa_ref[pl.ds(off, node_block), :]
        xb_blk = xb_ref[pl.ds(off, node_block), :]
        return h + _mm(oh_dst, xa_blk) + _mm(oh_src, xb_blk)

    h = lax.fori_loop(0, n_blocks, gather_block,
                      jnp.zeros((te, hp), jnp.float32))        # [TE, Hp]
    h = jnp.maximum(h, 0.0)                                    # MLP inner ReLU
    # Padded edges end up with m == b2, but their sentinel index never matches
    # a node row below, so they scatter nothing.
    m = _mm(h, w2_ref[...]) + b2_ref[...]                      # [TE, Hp]

    # ---- Scatter-add by dst: directly-built transposed one-hot per block. ----
    blk_iota_t = lax.broadcasted_iota(jnp.int32, (node_block, te), 0)

    def scatter_block(nb, carry):
        off = pl.multiple_of(nb * node_block, node_block)
        oh_dst_t = ((blk_iota_t + off) == dst_r).astype(ONEHOT_DTYPE)  # [NBLK,TE]
        acc_ref[pl.ds(off, node_block), :] += _mm(oh_dst_t, m)
        return carry

    lax.fori_loop(0, n_blocks, scatter_block, 0)


# ---------------------------------------------------------------------------
# Kernel 1: one MPNNLayer + outer F.relu -> [Np, Hp]
# (accumulates directly into out_ref — no extra [Np, Hp] scratch)
# ---------------------------------------------------------------------------
def _mpnn_layer_kernel(src_c_ref, dst_c_ref, dst_r_ref, x_ref, w1a_ref,
                       w1b_ref, b1_ref, w2_ref, b2_ref, out_ref,
                       xa_ref, xb_ref, *, node_block):
    _edge_tile_body(src_c_ref, dst_c_ref, dst_r_ref, x_ref, w1a_ref, w1b_ref,
                    b1_ref, w2_ref, b2_ref, xa_ref, xb_ref, out_ref,
                    node_block=node_block)

    @pl.when(pl.program_id(0) == pl.num_programs(0) - 1)
    def _finalize():
        out_ref[...] = jnp.maximum(out_ref[...], 0.0)          # outer F.relu


# ---------------------------------------------------------------------------
# Kernel 2: last MPNNLayer + F.relu + global_mean_pool + final Linear -> [B, Op]
# ---------------------------------------------------------------------------
def _mpnn_last_layer_kernel(src_c_ref, dst_c_ref, dst_r_ref, x_ref, w1a_ref,
                            w1b_ref, b1_ref, w2_ref, b2_ref, pool_ref, wl_ref,
                            bl_ref, out_ref, xa_ref, xb_ref, acc_ref, *,
                            node_block):
    _edge_tile_body(src_c_ref, dst_c_ref, dst_r_ref, x_ref, w1a_ref, w1b_ref,
                    b1_ref, w2_ref, b2_ref, xa_ref, xb_ref, acc_ref,
                    node_block=node_block)

    @pl.when(pl.program_id(0) == pl.num_programs(0) - 1)
    def _finalize():
        h_nodes = jnp.maximum(acc_ref[...], 0.0)               # outer F.relu
        pooled = _mm(pool_ref[...], h_nodes)                   # mean pool [B,Hp]
        out_ref[...] = _mm(pooled, wl_ref[...]) + bl_ref[...]  # final Linear


# ---------------------------------------------------------------------------
# Cost estimates (advisory, lets XLA overlap surrounding work)
# ---------------------------------------------------------------------------
def _cost_estimate(n_tiles, te, n_nodes, cp, hp, extra_flops=0, extra_bytes=0):
    flops = (4 * n_nodes * cp * hp                             # xa / xb pre-proj
             + n_tiles * (6 * te * n_nodes * hp + 2 * te * hp * hp)
             + extra_flops)
    bytes_accessed = ((n_nodes * cp + 2 * cp * hp + hp * hp + 2 * hp
                       + 3 * n_tiles * te + n_nodes * hp) * 4 + extra_bytes)
    return pl.CostEstimate(flops=int(flops), transcendentals=0,
                           bytes_accessed=int(bytes_accessed))


# ---------------------------------------------------------------------------
# pallas_call wrappers
# ---------------------------------------------------------------------------
def mpnn_layer(src_c, dst_c, dst_r, x, w1a, w1b, b1, w2, b2, *, node_block):
    n_tiles, te, _ = src_c.shape
    n, cp = x.shape
    hp = w2.shape[1]
    const2 = lambda t: (0, 0)
    col_spec = pl.BlockSpec((1, te, 1), lambda t: (t, 0, 0))
    row_spec = pl.BlockSpec((1, 1, te), lambda t: (t, 0, 0))
    grid_spec = pltpu.PrefetchScalarGridSpec(
        num_scalar_prefetch=0,
        grid=(n_tiles,),
        in_specs=[col_spec, col_spec, row_spec,
                  pl.BlockSpec(x.shape, const2),
                  pl.BlockSpec(w1a.shape, const2),
                  pl.BlockSpec(w1b.shape, const2),
                  pl.BlockSpec(b1.shape, const2),
                  pl.BlockSpec(w2.shape, const2),
                  pl.BlockSpec(b2.shape, const2)],
        out_specs=pl.BlockSpec((n, hp), const2),
        scratch_shapes=[pltpu.VMEM((n, hp), jnp.float32),      # xa = x@W1a + b1
                        pltpu.VMEM((n, hp), jnp.float32)])     # xb = x@W1b
    return pl.pallas_call(
        functools.partial(_mpnn_layer_kernel, node_block=node_block),
        out_shape=jax.ShapeDtypeStruct((n, hp), jnp.float32),
        grid_spec=grid_spec,
        compiler_params=_compiler_params(),
        cost_estimate=_cost_estimate(n_tiles, te, n, cp, hp),
    )(src_c, dst_c, dst_r, x, w1a, w1b, b1, w2, b2)


def mpnn_layer_pool(src_c, dst_c, dst_r, x, w1a, w1b, b1, w2, b2,
                    pool_mat, wl, bl, *, node_block):
    n_tiles, te, _ = src_c.shape
    n, cp = x.shape
    hp = w2.shape[1]
    n_graphs, op = pool_mat.shape[0], wl.shape[1]
    const2 = lambda t: (0, 0)
    col_spec = pl.BlockSpec((1, te, 1), lambda t: (t, 0, 0))
    row_spec = pl.BlockSpec((1, 1, te), lambda t: (t, 0, 0))
    grid_spec = pltpu.PrefetchScalarGridSpec(
        num_scalar_prefetch=0,
        grid=(n_tiles,),
        in_specs=[col_spec, col_spec, row_spec,
                  pl.BlockSpec(x.shape, const2),
                  pl.BlockSpec(w1a.shape, const2),
                  pl.BlockSpec(w1b.shape, const2),
                  pl.BlockSpec(b1.shape, const2),
                  pl.BlockSpec(w2.shape, const2),
                  pl.BlockSpec(b2.shape, const2),
                  pl.BlockSpec(pool_mat.shape, const2),
                  pl.BlockSpec(wl.shape, const2),
                  pl.BlockSpec(bl.shape, const2)],
        out_specs=pl.BlockSpec((n_graphs, op), const2),
        scratch_shapes=[pltpu.VMEM((n, hp), jnp.float32),      # xa
                        pltpu.VMEM((n, hp), jnp.float32),      # xb
                        pltpu.VMEM((n, hp), jnp.float32)])     # scatter acc
    extra_flops = 2 * n_graphs * n * hp + 2 * n_graphs * hp * op
    extra_bytes = (n_graphs * n + hp * op + op + n_graphs * op) * 4
    return pl.pallas_call(
        functools.partial(_mpnn_last_layer_kernel, node_block=node_block),
        out_shape=jax.ShapeDtypeStruct((n_graphs, op), jnp.float32),
        grid_spec=grid_spec,
        compiler_params=_compiler_params(),
        cost_estimate=_cost_estimate(n_tiles, te, n, cp, hp,
                                     extra_flops, extra_bytes),
    )(src_c, dst_c, dst_r, x, w1a, w1b, b1, w2, b2, pool_mat, wl, bl)


# ---------------------------------------------------------------------------
# Parameter init (torch.nn.Linear-style uniform) + one-time kernel prep
# ---------------------------------------------------------------------------
def linear_params(key, fan_in, fan_out):
    k = 1.0 / np.sqrt(fan_in)
    kw, kb = jax.random.split(key)
    w = jax.random.uniform(kw, (fan_in, fan_out), jnp.float32, -k, k)
    b = jax.random.uniform(kb, (1, fan_out), jnp.float32, -k, k)
    return w, b


def init_mpnn_params(key, in_channels, hidden_channels, out_channels, num_layers=2):
    layers = []
    c_in = in_channels
    for _ in range(num_layers):
        key, k1, k2 = jax.random.split(key, 3)
        w1, b1 = linear_params(k1, 2 * c_in, hidden_channels)
        w2, b2 = linear_params(k2, hidden_channels, hidden_channels)
        layers.append((w1, b1, w2, b2))
        c_in = hidden_channels
    key, kl = jax.random.split(key)
    wl, bl = linear_params(kl, hidden_channels, out_channels)
    return {"layers": layers, "lin": (wl, bl)}


def _pad2(a, rows, cols):
    return jnp.pad(a, ((0, rows - a.shape[0]), (0, cols - a.shape[1])))


def pad_params_for_kernel(params, in_channels):
    """Split W1 into x_i / x_j halves and zero-pad all lane dims to 128 (once)."""
    layers_p = []
    c_in = in_channels
    for (w1, b1, w2, b2) in params["layers"]:
        h = w2.shape[1]
        cp, hp = _round_up(c_in, LANE), _round_up(h, LANE)
        layers_p.append((_pad2(w1[:c_in], cp, hp),     # W1a  (x_i / dst half)
                         _pad2(w1[c_in:], cp, hp),     # W1b  (x_j / src half)
                         _pad2(b1, 1, hp),
                         _pad2(w2, hp, hp),
                         _pad2(b2, 1, hp)))
        c_in = h
    wl, bl = params["lin"]
    hp, op = _round_up(wl.shape[0], LANE), _round_up(wl.shape[1], LANE)
    return {"layers": layers_p,
            "lin": (_pad2(wl, hp, op), _pad2(bl, 1, op)),
            "out_channels": wl.shape[1]}


def choose_node_padding(num_nodes, node_block_target=NODE_BLOCK_TARGET):
    """Pad N to a multiple of 128 and pick a node block that divides it."""
    n_pad = _round_up(max(num_nodes, 8), LANE)
    node_block = min(node_block_target, n_pad)
    n_pad = _round_up(n_pad, node_block)
    return n_pad, node_block


def prepare_edges(src, dst, padded_num_nodes, edge_tile=None):
    """Pad E to a multiple of edge_tile (sentinel index = padded_num_nodes,
    which never matches any real or padded node) and ship the indices in both
    layouts: column [T, TE, 1] for the gather one-hots and row [T, 1, TE] for
    the directly-transposed scatter one-hot. Static per graph — call once."""
    if edge_tile is None:
        edge_tile = default_edge_tile()
    e = int(src.shape[0])
    n_tiles = max(1, -(-e // edge_tile))
    e_pad = n_tiles * edge_tile

    def pad(idx):
        idx = jnp.asarray(idx, jnp.int32)
        return jnp.pad(idx, (0, e_pad - e), constant_values=padded_num_nodes)

    src_p, dst_p = pad(src), pad(dst)
    return (src_p.reshape(n_tiles, edge_tile, 1),
            dst_p.reshape(n_tiles, edge_tile, 1),
            dst_p.reshape(n_tiles, 1, edge_tile))


def prepare_pool(batch, num_graphs, padded_num_nodes):
    """[B, Np] mean-pool matrix (zero columns for padded nodes). Call once."""
    n = batch.shape[0]
    onehot = jax.nn.one_hot(batch, num_graphs, dtype=jnp.float32)     # [N, B]
    counts = jnp.maximum(onehot.sum(axis=0), 1.0)
    pool = (onehot / counts[None, :]).T                               # [B, N]
    return jnp.pad(pool, ((0, 0), (0, padded_num_nodes - n)))


# ---------------------------------------------------------------------------
# Full forward
# ---------------------------------------------------------------------------
def mpnn_forward(x, src_c, dst_c, dst_r, pool_mat, pparams, node_block):
    n_pad = pool_mat.shape[1]
    cp0 = pparams["layers"][0][0].shape[0]
    x = jnp.pad(x, ((0, n_pad - x.shape[0]), (0, cp0 - x.shape[1])))
    layers = pparams["layers"]
    for lp in layers[:-1]:
        x = mpnn_layer(src_c, dst_c, dst_r, x, *lp, node_block=node_block)
    wl, bl = pparams["lin"]
    out = mpnn_layer_pool(src_c, dst_c, dst_r, x, *layers[-1], pool_mat, wl, bl,
                          node_block=node_block)
    return out[:, :pparams["out_channels"]]


# ---------------------------------------------------------------------------
# Pure-JAX reference for correctness check
# ---------------------------------------------------------------------------
def mpnn_reference(x, src, dst, batch, params, num_nodes, num_graphs):
    for (w1, b1, w2, b2) in params["layers"]:
        x_i = x[dst]
        x_j = x[src]
        h = jnp.maximum(jnp.concatenate([x_i, x_j], axis=1) @ w1 + b1, 0.0)
        m = h @ w2 + b2
        agg = jax.ops.segment_sum(m, dst, num_segments=num_nodes)
        x = jnp.maximum(agg, 0.0)
    sums = jax.ops.segment_sum(x, batch, num_segments=num_graphs)
    counts = jax.ops.segment_sum(jnp.ones((x.shape[0],), jnp.float32), batch,
                                 num_segments=num_graphs)
    pooled = sums / counts[:, None]
    wl, bl = params["lin"]
    return pooled @ wl + bl


if __name__ == "__main__":
    key = jax.random.PRNGKey(0)

    # Small synthetic graph batch: 2 graphs of 4 nodes each (two 4-cycles).
    N = 8                 # num nodes
    in_channels = 4
    hidden_channels = 32
    out_channels = 8
    num_graphs = 2

    base_edges = [(0, 1), (1, 2), (2, 3), (3, 0),
                  (4, 5), (5, 6), (6, 7), (7, 4)]
    edges = base_edges + [(b, a) for (a, b) in base_edges]   # both directions
    edge_index = np.array(edges, dtype=np.int32).T            # [2, 16]

    # add_self_loops(edge_index, num_nodes=N)
    self_loops = np.stack([np.arange(N, dtype=np.int32)] * 2, axis=0)
    edge_index_sl = np.concatenate([edge_index, self_loops], axis=1)   # [2, 24]
    src = jnp.asarray(edge_index_sl[0])   # x_j indices
    dst = jnp.asarray(edge_index_sl[1])   # x_i indices / aggregation targets

    batch = jnp.asarray(np.array([0, 0, 0, 0, 1, 1, 1, 1], dtype=np.int32))

    key, kx, kp = jax.random.split(key, 3)
    x = jax.random.normal(kx, (N, in_channels), dtype=jnp.float32)
    params = init_mpnn_params(kp, in_channels, hidden_channels, out_channels,
                              num_layers=2)

    # One-time (static-graph) prep, hoisted out of the forward path.
    pparams = pad_params_for_kernel(params, in_channels)
    n_padded, node_block = choose_node_padding(N)          # Np=128, NBLK=128
    # edge_tile=16 exercises the multi-tile accumulator grid at toy scale; use
    # default_edge_tile() (256 on v7x, 512 on v5e/v6e) for real graphs.
    src_c, dst_c, dst_r = prepare_edges(src, dst, n_padded, edge_tile=16)
    pool_mat = prepare_pool(batch, num_graphs, n_padded)

    out = mpnn_forward(x, src_c, dst_c, dst_r, pool_mat, pparams, node_block)
    out = jax.block_until_ready(out)

    ref = jax.block_until_ready(
        mpnn_reference(x, src, dst, batch, params, N, num_graphs))

    assert out.shape == (num_graphs, out_channels), out.shape
    np.testing.assert_allclose(np.asarray(out), np.asarray(ref),
                               rtol=1e-4, atol=1e-4)
    print("KERNEL_OK")
</pallas_src>

<mosaic_0001>
module attributes {stable_mosaic.version = 11 : i64} {
  func.func @_mpnn_layer_kernel(%arg0: i32, %arg1: memref<1x16x1xi32, #tpu.memory_space<vmem>>, %arg2: memref<1x16x1xi32, #tpu.memory_space<vmem>>, %arg3: memref<1x1x16xi32, #tpu.memory_space<vmem>>, %arg4: memref<128x128xf32, #tpu.memory_space<vmem>>, %arg5: memref<128x128xf32, #tpu.memory_space<vmem>>, %arg6: memref<128x128xf32, #tpu.memory_space<vmem>>, %arg7: memref<1x128xf32, #tpu.memory_space<vmem>>, %arg8: memref<128x128xf32, #tpu.memory_space<vmem>>, %arg9: memref<1x128xf32, #tpu.memory_space<vmem>>, %arg10: memref<128x128xf32, #tpu.memory_space<vmem>>, %arg11: memref<128x128xf32, #tpu.memory_space<vmem>>, %arg12: memref<128x128xf32, #tpu.memory_space<vmem>>) attributes {dimension_semantics = [#tpu.dimension_semantics<arbitrary>], iteration_bounds = array<i64: 2>, scalar_prefetch = 0 : i64, scratch_operands = 2 : i64, tpu.core_type = #tpu.core_type<tc>, window_params = [{transform_indices = @transform_0, window_bounds = array<i64: 1, 16, 1>}, {transform_indices = @transform_1, window_bounds = array<i64: 1, 16, 1>}, {transform_indices = @transform_2, window_bounds = array<i64: 1, 1, 16>}, {pipeline_mode = #tpu.pipeline_mode<synchronous>, transform_indices = @transform_3, window_bounds = array<i64: 128, 128>}, {pipeline_mode = #tpu.pipeline_mode<synchronous>, transform_indices = @transform_4, window_bounds = array<i64: 128, 128>}, {pipeline_mode = #tpu.pipeline_mode<synchronous>, transform_indices = @transform_5, window_bounds = array<i64: 128, 128>}, {pipeline_mode = #tpu.pipeline_mode<synchronous>, transform_indices = @transform_6, window_bounds = array<i64: 1, 128>}, {pipeline_mode = #tpu.pipeline_mode<synchronous>, transform_indices = @transform_7, window_bounds = array<i64: 128, 128>}, {pipeline_mode = #tpu.pipeline_mode<synchronous>, transform_indices = @transform_8, window_bounds = array<i64: 1, 128>}, {pipeline_mode = #tpu.pipeline_mode<synchronous>, transform_indices = @transform_9, window_bounds = array<i64: 128, 128>}]} {
    %c0_i32 = arith.constant 0 : i32
    %0 = arith.cmpi eq, %arg0, %c0_i32 : i32
    %1 = arith.extui %0 : i1 to i32
    %c0_i32_0 = arith.constant 0 : i32
    %2 = arith.cmpi ne, %1, %c0_i32_0 : i32
    scf.if %2 {
      %c0_28 = arith.constant 0 : index
      %c0_29 = arith.constant 0 : index
      %62 = vector.load %arg4[%c0_28, %c0_29] : memref<128x128xf32, #tpu.memory_space<vmem>>, vector<128x128xf32>
      %c0_30 = arith.constant 0 : index
      %c0_31 = arith.constant 0 : index
      %63 = vector.load %arg5[%c0_30, %c0_31] : memref<128x128xf32, #tpu.memory_space<vmem>>, vector<128x128xf32>
      %cst_32 = arith.constant dense<0.000000e+00> : vector<128x128xf32>
      %64 = tpu.matmul %62, %63, %cst_32 {dimension_numbers = #tpu.dot_dimension_numbers<[1], [0], [0], [1], [0, 0, 1, 1], [], []>} : vector<128x128xf32>, vector<128x128xf32>, vector<128x128xf32> -> vector<128x128xf32>
      %c0_33 = arith.constant 0 : index
      %c0_34 = arith.constant 0 : index
      %65 = vector.load %arg7[%c0_33, %c0_34] : memref<1x128xf32, #tpu.memory_space<vmem>>, vector<1x128xf32>
      %66 = vector.broadcast %65 : vector<1x128xf32> to vector<128x128xf32>
      %67 = arith.addf %64, %66 : vector<128x128xf32>
      %c0_35 = arith.constant 0 : index
      %c0_36 = arith.constant 0 : index
      %68 = vector.load %arg11[%c0_35, %c0_36] : memref<128x128xf32, #tpu.memory_space<vmem>>, vector<128x128xf32>
      tpu.vector_store %arg11[%c0_35, %c0_36], %67 {strides = array<i32>} : memref<128x128xf32, #tpu.memory_space<vmem>>, vector<128x128xf32>,
      %c0_37 = arith.constant 0 : index
      %c0_38 = arith.constant 0 : index
      %69 = vector.load %arg6[%c0_37, %c0_38] : memref<128x128xf32, #tpu.memory_space<vmem>>, vector<128x128xf32>
      %cst_39 = arith.constant dense<0.000000e+00> : vector<128x128xf32>
      %70 = tpu.matmul %62, %69, %cst_39 {dimension_numbers = #tpu.dot_dimension_numbers<[1], [0], [0], [1], [0, 0, 1, 1], [], []>} : vector<128x128xf32>, vector<128x128xf32>, vector<128x128xf32> -> vector<128x128xf32>
      %c0_40 = arith.constant 0 : index
      %c0_41 = arith.constant 0 : index
      %71 = vector.load %arg12[%c0_40, %c0_41] : memref<128x128xf32, #tpu.memory_space<vmem>>, vector<128x128xf32>
      tpu.vector_store %arg12[%c0_40, %c0_41], %70 {strides = array<i32>} : memref<128x128xf32, #tpu.memory_space<vmem>>, vector<128x128xf32>,
      %cst_42 = arith.constant 0.000000e+00 : f32
      %72 = vector.broadcast %cst_42 : f32 to vector<128x128xf32>
      %c0_43 = arith.constant 0 : index
      %c0_44 = arith.constant 0 : index
      %73 = vector.load %arg10[%c0_43, %c0_44] : memref<128x128xf32, #tpu.memory_space<vmem>>, vector<128x128xf32>
      tpu.vector_store %arg10[%c0_43, %c0_44], %72 {strides = array<i32>} : memref<128x128xf32, #tpu.memory_space<vmem>>, vector<128x128xf32>,
    } else {
    }
    %c0 = arith.constant 0 : index
    %c0_1 = arith.constant 0 : index
    %c0_2 = arith.constant 0 : index
    %3 = vector.load %arg1[%c0, %c0_1, %c0_2] : memref<1x16x1xi32, #tpu.memory_space<vmem>>, vector<1x16x1xi32>
    %4 = vector.shape_cast %3 : vector<1x16x1xi32> to vector<16x1xi32>
    %c0_3 = arith.constant 0 : index
    %c0_4 = arith.constant 0 : index
    %c0_5 = arith.constant 0 : index
    %5 = vector.load %arg2[%c0_3, %c0_4, %c0_5] : memref<1x16x1xi32, #tpu.memory_space<vmem>>, vector<1x16x1xi32>
    %6 = vector.shape_cast %5 : vector<1x16x1xi32> to vector<16x1xi32>
    %c0_6 = arith.constant 0 : index
    %c0_7 = arith.constant 0 : index
    %c0_8 = arith.constant 0 : index
    %7 = vector.load %arg3[%c0_6, %c0_7, %c0_8] : memref<1x1x16xi32, #tpu.memory_space<vmem>>, vector<1x1x16xi32>
    %8 = vector.shape_cast %7 : vector<1x1x16xi32> to vector<1x16xi32>
    %9 = tpu.iota {dimensions = array<i32: 1>} : vector<16x128xi32>
    %cst = arith.constant 0.000000e+00 : f32
    %10 = vector.broadcast %cst : f32 to vector<16x128xf32>
    %c0_i32_9 = arith.constant 0 : i32
    %c128_i32 = arith.constant 128 : i32
    %11 = arith.muli %c0_i32_9, %c128_i32 : i32
    %12 = tpu.assume_multiple %11, 128 : i32
    %13 = vector.broadcast %12 : i32 to vector<16x128xi32>
    %14 = arith.addi %9, %13 : vector<16x128xi32>
    %15 = vector.broadcast %6 : vector<16x1xi32> to vector<16x128xi32>
    %16 = arith.cmpi eq, %14, %15 : vector<16x128xi32>
    %17 = arith.extui %16 : vector<16x128xi1> to vector<16x128xi32>
    %18 = arith.sitofp %17 : vector<16x128xi32> to vector<16x128xf32>
    %19 = arith.truncf %18 : vector<16x128xf32> to vector<16x128xbf16>
    %20 = vector.broadcast %4 : vector<16x1xi32> to vector<16x128xi32>
    %21 = arith.cmpi eq, %14, %20 : vector<16x128xi32>
    %22 = arith.extui %21 : vector<16x128xi1> to vector<16x128xi32>
    %23 = arith.sitofp %22 : vector<16x128xi32> to vector<16x128xf32>
    %24 = arith.truncf %23 : vector<16x128xf32> to vector<16x128xbf16>
    %25 = arith.index_cast %12 : i32 to index
    %c0_10 = arith.constant 0 : index
    %26 = vector.load %arg11[%25, %c0_10] : memref<128x128xf32, #tpu.memory_space<vmem>>, vector<128x128xf32>
    %27 = arith.index_cast %12 : i32 to index
    %c0_11 = arith.constant 0 : index
    %28 = vector.load %arg12[%27, %c0_11] : memref<128x128xf32, #tpu.memory_space<vmem>>, vector<128x128xf32>
    %29 = arith.extf %19 : vector<16x128xbf16> to vector<16x128xf32>
    %cst_12 = arith.constant dense<0.000000e+00> : vector<16x128xf32>
    %30 = tpu.matmul %29, %26, %cst_12 {dimension_numbers = #tpu.dot_dimension_numbers<[1], [0], [0], [1], [0, 0, 1, 1], [], []>} : vector<16x128xf32>, vector<128x128xf32>, vector<16x128xf32> -> vector<16x128xf32>
    %31 = arith.addf %10, %30 : vector<16x128xf32>
    %32 = arith.extf %24 : vector<16x128xbf16> to vector<16x128xf32>
    %cst_13 = arith.constant dense<0.000000e+00> : vector<16x128xf32>
    %33 = tpu.matmul %32, %28, %cst_13 {dimension_numbers = #tpu.dot_dimension_numbers<[1], [0], [0], [1], [0, 0, 1, 1], [], []>} : vector<16x128xf32>, vector<128x128xf32>, vector<16x128xf32> -> vector<16x128xf32>
    %34 = arith.addf %31, %33 : vector<16x128xf32>
    %c1_i32 = arith.constant 1 : i32
    %cst_14 = arith.constant 0.000000e+00 : f32
    %35 = vector.broadcast %cst_14 : f32 to vector<16x128xf32>
    %36 = arith.maximumf %34, %35 : vector<16x128xf32>
    %c0_15 = arith.constant 0 : index
    %c0_16 = arith.constant 0 : index
    %37 = vector.load %arg8[%c0_15, %c0_16] : memref<128x128xf32, #tpu.memory_space<vmem>>, vector<128x128xf32>
    %cst_17 = arith.constant dense<0.000000e+00> : vector<16x128xf32>
    %38 = tpu.matmul %36, %37, %cst_17 {dimension_numbers = #tpu.dot_dimension_numbers<[1], [0], [0], [1], [0, 0, 1, 1], [], []>} : vector<16x128xf32>, vector<128x128xf32>, vector<16x128xf32> -> vector<16x128xf32>
    %c0_18 = arith.constant 0 : index
    %c0_19 = arith.constant 0 : index
    %39 = vector.load %arg9[%c0_18, %c0_19] : memref<1x128xf32, #tpu.memory_space<vmem>>, vector<1x128xf32>
    %40 = vector.broadcast %39 : vector<1x128xf32> to vector<16x128xf32>
    %41 = arith.addf %38, %40 : vector<16x128xf32>
    %42 = tpu.iota {dimensions = array<i32: 0>} : vector<128x16xi32>
    %c0_i32_20 = arith.constant 0 : i32
    %c128_i32_21 = arith.constant 128 : i32
    %43 = arith.muli %c0_i32_20, %c128_i32_21 : i32
    %44 = tpu.assume_multiple %43, 128 : i32
    %45 = vector.broadcast %44 : i32 to vector<128x16xi32>
    %46 = arith.addi %42, %45 : vector<128x16xi32>
    %47 = vector.broadcast %8 : vector<1x16xi32> to vector<128x16xi32>
    %48 = arith.cmpi eq, %46, %47 : vector<128x16xi32>
    %49 = arith.extui %48 : vector<128x16xi1> to vector<128x16xi32>
    %50 = arith.sitofp %49 : vector<128x16xi32> to vector<128x16xf32>
    %51 = arith.truncf %50 : vector<128x16xf32> to vector<128x16xbf16>
    %52 = arith.index_cast %44 : i32 to index
    %c0_22 = arith.constant 0 : index
    %53 = vector.load %arg10[%52, %c0_22] : memref<128x128xf32, #tpu.memory_space<vmem>>, vector<128x128xf32>
    %54 = arith.extf %51 : vector<128x16xbf16> to vector<128x16xf32>
    %cst_23 = arith.constant dense<0.000000e+00> : vector<128x128xf32>
    %55 = tpu.matmul %54, %41, %cst_23 {dimension_numbers = #tpu.dot_dimension_numbers<[1], [0], [0], [1], [0, 0, 1, 1], [], []>} : vector<128x16xf32>, vector<16x128xf32>, vector<128x128xf32> -> vector<128x128xf32>
    %56 = arith.addf %53, %55 : vector<128x128xf32>
    %57 = arith.index_cast %44 : i32 to index
    %c0_24 = arith.constant 0 : index
    %58 = vector.load %arg10[%57, %c0_24] : memref<128x128xf32, #tpu.memory_space<vmem>>, vector<128x128xf32>
    tpu.vector_store %arg10[%57, %c0_24], %56 {strides = array<i32>} : memref<128x128xf32, #tpu.memory_space<vmem>>, vector<128x128xf32>,
    %c1_i32_25 = arith.constant 1 : i32
    %c1_i32_26 = arith.constant 1 : i32
    %59 = arith.cmpi eq, %arg0, %c1_i32_26 : i32
    %60 = arith.extui %59 : i1 to i32
    %c0_i32_27 = arith.constant 0 : i32
    %61 = arith.cmpi ne, %60, %c0_i32_27 : i32
    scf.if %61 {
      %c0_28 = arith.constant 0 : index
      %c0_29 = arith.constant 0 : index
      %62 = vector.load %arg10[%c0_28, %c0_29] : memref<128x128xf32, #tpu.memory_space<vmem>>, vector<128x128xf32>
      %cst_30 = arith.constant 0.000000e+00 : f32
      %63 = vector.broadcast %cst_30 : f32 to vector<128x128xf32>
      %64 = arith.maximumf %62, %63 : vector<128x128xf32>
      %c0_31 = arith.constant 0 : index
      %c0_32 = arith.constant 0 : index
      %65 = vector.load %arg10[%c0_31, %c0_32] : memref<128x128xf32, #tpu.memory_space<vmem>>, vector<128x128xf32>
      tpu.vector_store %arg10[%c0_31, %c0_32], %64 {strides = array<i32>} : memref<128x128xf32, #tpu.memory_space<vmem>>, vector<128x128xf32>,
    } else {
    }
    return
  }
  func.func @transform_0(%arg0: i32) -> (i32, i32, i32) {
    %c0_i32 = arith.constant 0 : i32
    %c0_i32_0 = arith.constant 0 : i32
    %c0_i32_1 = arith.constant 0 : i32
    return %arg0, %c0_i32, %c0_i32_0 : i32, i32, i32
  }
  func.func @transform_1(%arg0: i32) -> (i32, i32, i32) {
    %c0_i32 = arith.constant 0 : i32
    %c0_i32_0 = arith.constant 0 : i32
    %c0_i32_1 = arith.constant 0 : i32
    return %arg0, %c0_i32, %c0_i32_0 : i32, i32, i32
  }
  func.func @transform_2(%arg0: i32) -> (i32, i32, i32) {
    %c0_i32 = arith.constant 0 : i32
    %c0_i32_0 = arith.constant 0 : i32
    %c0_i32_1 = arith.constant 0 : i32
    return %arg0, %c0_i32, %c0_i32_0 : i32, i32, i32
  }
  func.func @transform_3(%arg0: i32) -> (i32, i32) {
    %c0_i32 = arith.constant 0 : i32
    %c0_i32_0 = arith.constant 0 : i32
    %c0_i32_1 = arith.constant 0 : i32
    return %c0_i32, %c0_i32_0 : i32, i32
  }
  func.func @transform_4(%arg0: i32) -> (i32, i32) {
    %c0_i32 = arith.constant 0 : i32
    %c0_i32_0 = arith.constant 0 : i32
    %c0_i32_1 = arith.constant 0 : i32
    return %c0_i32, %c0_i32_0 : i32, i32
  }
  func.func @transform_5(%arg0: i32) -> (i32, i32) {
    %c0_i32 = arith.constant 0 : i32
    %c0_i32_0 = arith.constant 0 : i32
    %c0_i32_1 = arith.constant 0 : i32
    return %c0_i32, %c0_i32_0 : i32, i32
  }
  func.func @transform_6(%arg0: i32) -> (i32, i32) {
    %c0_i32 = arith.constant 0 : i32
    %c0_i32_0 = arith.constant 0 : i32
    %c0_i32_1 = arith.constant 0 : i32
    return %c0_i32, %c0_i32_0 : i32, i32
  }
  func.func @transform_7(%arg0: i32) -> (i32, i32) {
    %c0_i32 = arith.constant 0 : i32
    %c0_i32_0 = arith.constant 0 : i32
    %c0_i32_1 = arith.constant 0 : i32
    return %c0_i32, %c0_i32_0 : i32, i32
  }
  func.func @transform_8(%arg0: i32) -> (i32, i32) {
    %c0_i32 = arith.constant 0 : i32
    %c0_i32_0 = arith.constant 0 : i32
    %c0_i32_1 = arith.constant 0 : i32
    return %c0_i32, %c0_i32_0 : i32, i32
  }
  func.func @transform_9(%arg0: i32) -> (i32, i32) {
    %c0_i32 = arith.constant 0 : i32
    %c0_i32_0 = arith.constant 0 : i32
    %c0_i32_1 = arith.constant 0 : i32
    return %c0_i32, %c0_i32_0 : i32, i32
  }
}

</mosaic_0001>

<llo_original>
// kernel: tpu_custom_call.1
$region0: #{tpu_custom_call.1}
  #allocation0 [shape = 'u32[]', space=smem, size = 0x4, offset = 0x4, fixed_abs, tag = 'smem constant byte address 0x4 - core index']
  #allocation1 [shape = 'u32[144,128]{1,0:T(1,128)}', space=vmem, size = 0x12000, scoped, tag = 'internal scratch']
  #allocation2 [shape = 'f32[128,128]{1,0:T(8,128)}', space=vmem, size = 0x10000, scoped, tag = 'scratch operand']
  #allocation3 [shape = 'f32[128,128]{1,0:T(8,128)}', space=vmem, size = 0x10000, scoped, tag = 'scratch operand']
  %s0 = inlined_call_operand.vmem [shape: s32[2,16,1], index: 0, kind: input, shape index: {}]
  %s1 = inlined_call_operand.vmem [shape: s32[2,16,1], index: 1, kind: input, shape index: {}]
  %s2 = inlined_call_operand.vmem [shape: s32[2,1,16], index: 2, kind: input, shape index: {}]
  %s3 = inlined_call_operand.hbm [shape: f32[128,128], index: 3, kind: input, shape index: {}]
  %s4 = inlined_call_operand.hbm [shape: f32[128,128], index: 4, kind: input, shape index: {}]
  %s5 = inlined_call_operand.hbm [shape: f32[128,128], index: 5, kind: input, shape index: {}]
  %s6 = inlined_call_operand.vmem [shape: f32[1,128], index: 6, kind: input, shape index: {}]
  %s7 = inlined_call_operand.hbm [shape: f32[128,128], index: 7, kind: input, shape index: {}]
  %s8 = inlined_call_operand.vmem [shape: f32[1,128], index: 8, kind: input, shape index: {}]
  %s9 = inlined_call_operand.hbm [shape: f32[128,128], index: 9, kind: output, shape index: {}]
  %s10 = sld [smem:[#allocation0]]
  $region93: #{tpu_custom_call.1} parent=0
    _
  %s12 = ssub.s32 1, %s10
  %s13 = scalar_select 0, %s12, %s10
  $region1: #{tpu_custom_call.1} parent=0
    #allocation4 [shape = 'u8[65536]{0}', space=vmem, size = 0x10000, scoped, tag = 'input window, operand 3, single buffered']
    #allocation5 [shape = 's32[2]{0}', space=sflag, size = 0x8, scoped, tag = 'scoped memory for tpu_custom_call.1']
    #allocation6 [shape = 's32[2]{0}', space=sflag, size = 0x8, scoped, tag = 'scoped memory for tpu_custom_call.1']
    #allocation7 [shape = 'u8[65536]{0}', space=vmem, size = 0x10000, scoped, tag = 'input window, operand 4, single buffered']
    #allocation8 [shape = 's32[1]{0}', space=sflag, size = 0x4, scoped, tag = 'scoped memory for tpu_custom_call.1']
    #allocation9 [shape = 'u8[65536]{0}', space=vmem, size = 0x10000, scoped, tag = 'input window, operand 5, single buffered']
    #allocation10 [shape = 'u8[65536]{0}', space=vmem, size = 0x10000, scoped, tag = 'input window, operand 7, single buffered']
    #allocation11 [shape = 's32[1]{0}', space=sflag, size = 0x4, scoped, tag = 'scoped memory for tpu_custom_call.1']
    #allocation12 [shape = 'u8[65536]{0}', space=vmem, size = 0x10000, scoped, tag = 'output window, operand 0, single buffered']
    %14 = vsyncpa [#allocation5], 0
    %15 = vsyncpa [#allocation8], 0
    %16 = vsyncpa [#allocation11], 0
    %17 = vsyncpa [#allocation6], 0
    loop: start=0, step=1, limit=4
    $region2: #{tpu_custom_call.1} parent=1 // loop_pre_header
      _
    $region3: #{tpu_custom_call.1} parent=1 // loop_header
      %s19 = sphi 0, %s23
      %p20 = scmp.ge.s32.totalorder %s19, 4
      %s29 = sphi 0, %s31
      %s32 = sphi 0, %s29
      %s33 = sphi 0, %s32
      %s49 = sphi 0, %s33
      %s55 = sphi 0, %s57
      %s58 = sphi 0, %s55
      %s59 = sphi 0, %s58
      %s75 = sphi 0, %s59
      %s81 = sphi 0, %s83
      %s84 = sphi 0, %s81
      %s85 = sphi 0, %s84
      %s101 = sphi 0, %s85
      %s105 = sphi 0, %s105
      %s107 = sphi 0, %s105
      %s108 = sphi 0, %s107
      %s122 = sphi 0, %s108
      %s126 = sphi 0, %s126
      %s128 = sphi 0, %s126
      %s129 = sphi 0, %s128
      %s143 = sphi 0, %s129
      %s147 = sphi 0, %s147
      %s149 = sphi 0, %s147
      %s150 = sphi 0, %s149
      %s164 = sphi 0, %s150
      %s168 = sphi 0, %s168
      %s170 = sphi 0, %s168
      %s171 = sphi 0, %s170
      %s185 = sphi 0, %s171
      %s189 = sphi 0, %s189
      %s191 = sphi 0, %s189
      %s192 = sphi 0, %s191
      %s206 = sphi 0, %s192
      %s210 = sphi 0, %s210
      %s212 = sphi 0, %s210
      %s213 = sphi 0, %s212
      %s227 = sphi 0, %s213
      %s231 = sphi 0, %s231
      %s233 = sphi 0, %s231
      %s234 = sphi 0, %s233
      %s248 = sphi 0, %s234
    $region4: #{tpu_custom_call.1} parent=1 // loop_header_branch
      %22 = sbr.rel (%p20) target = $region8
    $region5: #{tpu_custom_call.1} parent=1 // loop_body
      %s24 = ssub.s32 %s19, 1
      %s25 = ssub.s32 %s19, 2
      %s26 = sadd.s32 %s19, 1
      %s27 = ssub.s32 %s19, %s26
      %p28 = scmp.eq.s32.totalorder %s27, 0
      %s30 = sadd.s32 %s29, 1
      %s31 = scalar_select %p28, %s29, %s30
      %p34 = pneg %p28
      %p35 = scmp.eq.s32.totalorder %s19, 1
      %p36 = por %p34, %p35
      %p37 = scmp.ne.s32.totalorder %s29, %s32
      %p38 = scmp.eq.s32.totalorder %s19, 0
      %p39 = por %p37, %p38
      %p40 = scmp.ne.s32.totalorder %s29, %s32
      %p41 = scmp.eq.s32.totalorder %s24, 1
      %p42 = por %p40, %p41
      %p43 = scmp.ne.s32.totalorder %s32, %s33
      %p44 = scmp.eq.s32.totalorder %s24, 0
      %p45 = por %p43, %p44
      %p46 = scmp.ne.s32.totalorder %s32, %s33
      %p47 = scmp.eq.s32.totalorder %s25, 1
      %p48 = por %p46, %p47
      %p50 = scmp.ne.s32.totalorder %s33, %s49
      %p51 = scmp.eq.s32.totalorder %s25, 0
      %p52 = por %p50, %p51
      %s53 = ssub.s32 %s19, %s26
      %p54 = scmp.eq.s32.totalorder %s53, 0
      %s56 = sadd.s32 %s55, 1
      %s57 = scalar_select %p54, %s55, %s56
      %p60 = pneg %p54
      %p61 = scmp.eq.s32.totalorder %s19, 1
      %p62 = por %p60, %p61
      %p63 = scmp.ne.s32.totalorder %s55, %s58
      %p64 = scmp.eq.s32.totalorder %s19, 0
      %p65 = por %p63, %p64
      %p66 = scmp.ne.s32.totalorder %s55, %s58
      %p67 = scmp.eq.s32.totalorder %s24, 1
      %p68 = por %p66, %p67
      %p69 = scmp.ne.s32.totalorder %s58, %s59
      %p70 = scmp.eq.s32.totalorder %s24, 0
      %p71 = por %p69, %p70
      %p72 = scmp.ne.s32.totalorder %s58, %s59
      %p73 = scmp.eq.s32.totalorder %s25, 1
      %p74 = por %p72, %p73
      %p76 = scmp.ne.s32.totalorder %s59, %s75
      %p77 = scmp.eq.s32.totalorder %s25, 0
      %p78 = por %p76, %p77
      %s79 = ssub.s32 %s19, %s26
      %p80 = scmp.eq.s32.totalorder %s79, 0
      %s82 = sadd.s32 %s81, 1
      %s83 = scalar_select %p80, %s81, %s82
      %p86 = pneg %p80
      %p87 = scmp.eq.s32.totalorder %s19, 1
      %p88 = por %p86, %p87
      %p89 = scmp.ne.s32.totalorder %s81, %s84
      %p90 = scmp.eq.s32.totalorder %s19, 0
      %p91 = por %p89, %p90
      %p92 = scmp.ne.s32.totalorder %s81, %s84
      %p93 = scmp.eq.s32.totalorder %s24, 1
      %p94 = por %p92, %p93
      %p95 = scmp.ne.s32.totalorder %s84, %s85
      %p96 = scmp.eq.s32.totalorder %s24, 0
      %p97 = por %p95, %p96
      %p98 = scmp.ne.s32.totalorder %s84, %s85
      %p99 = scmp.eq.s32.totalorder %s25, 1
      %p100 = por %p98, %p99
      %p102 = scmp.ne.s32.totalorder %s85, %s101
      %p103 = scmp.eq.s32.totalorder %s25, 0
      %p104 = por %p102, %p103
      %s106 = sadd.s32 %s105, 1
      %p109 = scmp.eq.s32.totalorder %s19, 1
      %p110 = scmp.ne.s32.totalorder %s105, %s107
      %p111 = scmp.eq.s32.totalorder %s19, 0
      %p112 = por %p110, %p111
      %p113 = scmp.ne.s32.totalorder %s105, %s107
      %p114 = scmp.eq.s32.totalorder %s24, 1
      %p115 = por %p113, %p114
      %p116 = scmp.ne.s32.totalorder %s107, %s108
      %p117 = scmp.eq.s32.totalorder %s24, 0
      %p118 = por %p116, %p117
      %p119 = scmp.ne.s32.totalorder %s107, %s108
      %p120 = scmp.eq.s32.totalorder %s25, 1
      %p121 = por %p119, %p120
      %p123 = scmp.ne.s32.totalorder %s108, %s122
      %p124 = scmp.eq.s32.totalorder %s25, 0
      %p125 = por %p123, %p124
      %s127 = sadd.s32 %s126, 1
      %p130 = scmp.eq.s32.totalorder %s19, 1
      %p131 = scmp.ne.s32.totalorder %s126, %s128
      %p132 = scmp.eq.s32.totalorder %s19, 0
      %p133 = por %p131, %p132
      %p134 = scmp.ne.s32.totalorder %s126, %s128
      %p135 = scmp.eq.s32.totalorder %s24, 1
      %p136 = por %p134, %p135
      %p137 = scmp.ne.s32.totalorder %s128, %s129
      %p138 = scmp.eq.s32.totalorder %s24, 0
      %p139 = por %p137, %p138
      %p140 = scmp.ne.s32.totalorder %s128, %s129
      %p141 = scmp.eq.s32.totalorder %s25, 1
      %p142 = por %p140, %p141
      %p144 = scmp.ne.s32.totalorder %s129, %s143
      %p145 = scmp.eq.s32.totalorder %s25, 0
      %p146 = por %p144, %p145
      %s148 = sadd.s32 %s147, 1
      %p151 = scmp.eq.s32.totalorder %s19, 1
      %p152 = scmp.ne.s32.totalorder %s147, %s149
      %p153 = scmp.eq.s32.totalorder %s19, 0
      %p154 = por %p152, %p153
      %p155 = scmp.ne.s32.totalorder %s147, %s149
      %p156 = scmp.eq.s32.totalorder %s24, 1
      %p157 = por %p155, %p156
      %p158 = scmp.ne.s32.totalorder %s149, %s150
      %p159 = scmp.eq.s32.totalorder %s24, 0
      %p160 = por %p158, %p159
      %p161 = scmp.ne.s32.totalorder %s149, %s150
      %p162 = scmp.eq.s32.totalorder %s25, 1
      %p163 = por %p161, %p162
      %p165 = scmp.ne.s32.totalorder %s150, %s164
      %p166 = scmp.eq.s32.totalorder %s25, 0
      %p167 = por %p165, %p166
      %s169 = sadd.s32 %s168, 1
      %p172 = scmp.eq.s32.totalorder %s19, 1
      %p173 = scmp.ne.s32.totalorder %s168, %s170
      %p174 = scmp.eq.s32.totalorder %s19, 0
      %p175 = por %p173, %p174
      %p176 = scmp.ne.s32.totalorder %s168, %s170
      %p177 = scmp.eq.s32.totalorder %s24, 1
      %p178 = por %p176, %p177
      %p179 = scmp.ne.s32.totalorder %s170, %s171
      %p180 = scmp.eq.s32.totalorder %s24, 0
      %p181 = por %p179, %p180
      %p182 = scmp.ne.s32.totalorder %s170, %s171
      %p183 = scmp.eq.s32.totalorder %s25, 1
      %p184 = por %p182, %p183
      %p186 = scmp.ne.s32.totalorder %s171, %s185
      %p187 = scmp.eq.s32.totalorder %s25, 0
      %p188 = por %p186, %p187
      %s190 = sadd.s32 %s189, 1
      %p193 = scmp.eq.s32.totalorder %s19, 1
      %p194 = scmp.ne.s32.totalorder %s189, %s191
      %p195 = scmp.eq.s32.totalorder %s19, 0
      %p196 = por %p194, %p195
      %p197 = scmp.ne.s32.totalorder %s189, %s191
      %p198 = scmp.eq.s32.totalorder %s24, 1
      %p199 = por %p197, %p198
      %p200 = scmp.ne.s32.totalorder %s191, %s192
      %p201 = scmp.eq.s32.totalorder %s24, 0
      %p202 = por %p200, %p201
      %p203 = scmp.ne.s32.totalorder %s191, %s192
      %p204 = scmp.eq.s32.totalorder %s25, 1
      %p205 = por %p203, %p204
      %p207 = scmp.ne.s32.totalorder %s192, %s206
      %p208 = scmp.eq.s32.totalorder %s25, 0
      %p209 = por %p207, %p208
      %s211 = sadd.s32 %s210, 1
      %p214 = scmp.eq.s32.totalorder %s19, 1
      %p215 = scmp.ne.s32.totalorder %s210, %s212
      %p216 = scmp.eq.s32.totalorder %s19, 0
      %p217 = por %p215, %p216
      %p218 = scmp.ne.s32.totalorder %s210, %s212
      %p219 = scmp.eq.s32.totalorder %s24, 1
      %p220 = por %p218, %p219
      %p221 = scmp.ne.s32.totalorder %s212, %s213
      %p222 = scmp.eq.s32.totalorder %s24, 0
      %p223 = por %p221, %p222
      %p224 = scmp.ne.s32.totalorder %s212, %s213
      %p225 = scmp.eq.s32.totalorder %s25, 1
      %p226 = por %p224, %p225
      %p228 = scmp.ne.s32.totalorder %s213, %s227
      %p229 = scmp.eq.s32.totalorder %s25, 0
      %p230 = por %p228, %p229
      %s232 = sadd.s32 %s231, 1
      %p235 = scmp.eq.s32.totalorder %s19, 1
      %p236 = scmp.ne.s32.totalorder %s231, %s233
      %p237 = scmp.eq.s32.totalorder %s19, 0
      %p238 = por %p236, %p237
      %p239 = scmp.ne.s32.totalorder %s231, %s233
      %p240 = scmp.eq.s32.totalorder %s24, 1
      %p241 = por %p239, %p240
      %p242 = scmp.ne.s32.totalorder %s233, %s234
      %p243 = scmp.eq.s32.totalorder %s24, 0
      %p244 = por %p242, %p243
      %p245 = scmp.ne.s32.totalorder %s233, %s234
      %p246 = scmp.eq.s32.totalorder %s25, 1
      %p247 = por %p245, %p246
      %p249 = scmp.ne.s32.totalorder %s234, %s248
      %p250 = scmp.eq.s32.totalorder %s25, 0
      %p251 = por %p249, %p250
      %p252 = scmp.le.s32.totalorder 1, %s19
      %p253 = scmp.lt.s32.totalorder %s19, 3
      %p254 = pnand %p252, %p253
      %p255 = pneg %p254
      // Predicated region
      $region9: #{tpu_custom_call.1} parent=5 // pred_check
        _
      $region10: #{tpu_custom_call.1} parent=5 // pred_check_branch
        %257 = sbr.rel (%p254) target = $region12
      $region11: #{tpu_custom_call.1} parent=5 // pred_region
        %s258 = ssub.s32 %s19, 1
        // Predicated region
        $region13: #{tpu_custom_call.1} parent=11 // pred_check
          %p259 = pneg %p118
        $region14: #{tpu_custom_call.1} parent=11 // pred_check_branch
          %261 = sbr.rel (%p259) target = $region16
        $region15: #{tpu_custom_call.1} parent=11 // pred_region
          %s263 = ssub.s32 2048, 2048
          %264 = vsyncadd [#allocation5], %s263
          %s265 = sshll.u32 [#allocation4], 4
          %s266 = int_to_ptr.vmem [resolvable:$true] %s265
          %271 = dma.hbm_to_vmem [thread:$0]  %s3, 2048, %s266, [#allocation5], 128, 128, 8
        $region16: #{tpu_custom_call.1} parent=11 // pred_fallthru
          _
        // Predicated region
        $region17: #{tpu_custom_call.1} parent=11 // pred_check
          %p272 = pneg %p139
        $region18: #{tpu_custom_call.1} parent=11 // pred_check_branch
          %274 = sbr.rel (%p272) target = $region20
        $region19: #{tpu_custom_call.1} parent=11 // pred_region
          %s276 = ssub.s32 2048, 2048
          %277 = vsyncadd [#allocation8], %s276
          %s278 = sshll.u32 [#allocation7], 4
          %s279 = int_to_ptr.vmem [resolvable:$true] %s278
          %284 = dma.hbm_to_vmem [thread:$0]  %s4, 2048, %s279, [#allocation8], 128, 128, 8
        $region20: #{tpu_custom_call.1} parent=11 // pred_fallthru
          _
        // Predicated region
        $region21: #{tpu_custom_call.1} parent=11 // pred_check
          %p285 = pneg %p160
        $region22: #{tpu_custom_call.1} parent=11 // pred_check_branch
          %287 = sbr.rel (%p285) target = $region24
        $region23: #{tpu_custom_call.1} parent=11 // pred_region
          %s289 = ssub.s32 2048, 2048
          %290 = vsyncadd [#allocation8], %s289
          %s291 = sshll.u32 [#allocation9], 4
          %s292 = int_to_ptr.vmem [resolvable:$true] %s291
          %297 = dma.hbm_to_vmem [thread:$0]  %s5, 2048, %s292, [#allocation8], 128, 128, 8
        $region24: #{tpu_custom_call.1} parent=11 // pred_fallthru
          _
        // Predicated region
        $region25: #{tpu_custom_call.1} parent=11 // pred_check
          %p298 = pneg %p181
        $region26: #{tpu_custom_call.1} parent=11 // pred_check_branch
          %300 = sbr.rel (%p298) target = $region28
        $region27: #{tpu_custom_call.1} parent=11 // pred_region
          _
        $region28: #{tpu_custom_call.1} parent=11 // pred_fallthru
          _
        // Predicated region
        $region29: #{tpu_custom_call.1} parent=11 // pred_check
          %p301 = pneg %p202
        $region30: #{tpu_custom_call.1} parent=11 // pred_check_branch
          %303 = sbr.rel (%p301) target = $region32
        $region31: #{tpu_custom_call.1} parent=11 // pred_region
          %s305 = ssub.s32 2048, 2048
          %306 = vsyncadd [#allocation11], %s305
          %s307 = sshll.u32 [#allocation10], 4
          %s308 = int_to_ptr.vmem [resolvable:$true] %s307
          %313 = dma.hbm_to_vmem [thread:$0]  %s7, 2048, %s308, [#allocation11], 128, 128, 8
        $region32: #{tpu_custom_call.1} parent=11 // pred_fallthru
          _
        // Predicated region
        $region33: #{tpu_custom_call.1} parent=11 // pred_check
          %p314 = pneg %p223
        $region34: #{tpu_custom_call.1} parent=11 // pred_check_branch
          %316 = sbr.rel (%p314) target = $region36
        $region35: #{tpu_custom_call.1} parent=11 // pred_region
          _
        $region36: #{tpu_custom_call.1} parent=11 // pred_fallthru
          _
      $region12: #{tpu_custom_call.1} parent=5 // pred_fallthru
        _
      %p317 = scmp.lt.s32.totalorder %s19, 2
      // Predicated region
      $region37: #{tpu_custom_call.1} parent=5 // pred_check
        %p318 = pneg %p317
      $region38: #{tpu_custom_call.1} parent=5 // pred_check_branch
        %320 = sbr.rel (%p318) target = $region40
      $region39: #{tpu_custom_call.1} parent=5 // pred_region
        // Predicated region
        $region41: #{tpu_custom_call.1} parent=39 // pred_check
          %p321 = pneg %p39
        $region42: #{tpu_custom_call.1} parent=39 // pred_check_branch
          %323 = sbr.rel (%p321) target = $region44
        $region43: #{tpu_custom_call.1} parent=39 // pred_region
          %p324 = scmp.lt.s32.totalorder %s19, 1
          %s325 = scalar_select %p324, %s19, 1
          %s326 = smul.addr %s325, 2
          %s327 = smul.addr %s326, 8
          %s328 = scalar_lea.vmem %s0, %s327
        $region44: #{tpu_custom_call.1} parent=39 // pred_fallthru
          _
        // Predicated region
        $region45: #{tpu_custom_call.1} parent=39 // pred_check
          %p329 = pneg %p65
        $region46: #{tpu_custom_call.1} parent=39 // pred_check_branch
          %331 = sbr.rel (%p329) target = $region48
        $region47: #{tpu_custom_call.1} parent=39 // pred_region
          %p332 = scmp.lt.s32.totalorder %s19, 1
          %s333 = scalar_select %p332, %s19, 1
          %s334 = smul.addr %s333, 2
          %s335 = smul.addr %s334, 8
          %s336 = scalar_lea.vmem %s1, %s335
        $region48: #{tpu_custom_call.1} parent=39 // pred_fallthru
          _
        // Predicated region
        $region49: #{tpu_custom_call.1} parent=39 // pred_check
          %p337 = pneg %p91
        $region50: #{tpu_custom_call.1} parent=39 // pred_check_branch
          %339 = sbr.rel (%p337) target = $region52
        $region51: #{tpu_custom_call.1} parent=39 // pred_region
          %p340 = scmp.lt.s32.totalorder %s19, 1
          %s341 = scalar_select %p340, %s19, 1
          %s342 = scalar_lea.vmem %s2, %s341
        $region52: #{tpu_custom_call.1} parent=39 // pred_fallthru
          _
      $region40: #{tpu_custom_call.1} parent=5 // pred_fallthru
        _
      %p343 = scmp.le.s32.totalorder 1, %s19
      %p344 = scmp.lt.s32.totalorder %s19, 3
      %p345 = pnand %p343, %p344
      %p346 = pneg %p345
      // Predicated region
      $region53: #{tpu_custom_call.1} parent=5 // pred_check
        _
      $region54: #{tpu_custom_call.1} parent=5 // pred_check_branch
        %348 = sbr.rel (%p345) target = $region56
      $region55: #{tpu_custom_call.1} parent=5 // pred_region
        %s349 = ssub.s32 %s19, 1
        // Predicated region
        $region57: #{tpu_custom_call.1} parent=55 // pred_check
          %p350 = pneg %p118
        $region58: #{tpu_custom_call.1} parent=55 // pred_check_branch
          %352 = sbr.rel (%p350) target = $region60
        $region59: #{tpu_custom_call.1} parent=55 // pred_region
          %353 = dma.done [#allocation5], 2048
        $region60: #{tpu_custom_call.1} parent=55 // pred_fallthru
          _
        // Predicated region
        $region61: #{tpu_custom_call.1} parent=55 // pred_check
          %p354 = pneg %p139
        $region62: #{tpu_custom_call.1} parent=55 // pred_check_branch
          %356 = sbr.rel (%p354) target = $region64
        $region63: #{tpu_custom_call.1} parent=55 // pred_region
          %357 = dma.done [#allocation8], 2048
        $region64: #{tpu_custom_call.1} parent=55 // pred_fallthru
          _
        // Predicated region
        $region65: #{tpu_custom_call.1} parent=55 // pred_check
          %p358 = pneg %p160
        $region66: #{tpu_custom_call.1} parent=55 // pred_check_branch
          %360 = sbr.rel (%p358) target = $region68
        $region67: #{tpu_custom_call.1} parent=55 // pred_region
          %361 = dma.done [#allocation8], 2048
        $region68: #{tpu_custom_call.1} parent=55 // pred_fallthru
          _
        // Predicated region
        $region69: #{tpu_custom_call.1} parent=55 // pred_check
          %p362 = pneg %p202
        $region70: #{tpu_custom_call.1} parent=55 // pred_check_branch
          %364 = sbr.rel (%p362) target = $region72
        $region71: #{tpu_custom_call.1} parent=55 // pred_region
          %365 = dma.done [#allocation11], 2048
        $region72: #{tpu_custom_call.1} parent=55 // pred_fallthru
          _
        %p366 = scmp.lt.s32.totalorder %s24, 1
        %s367 = scalar_select %p366, %s24, 1
        %s368 = smul.addr %s367, 2
        %s369 = smul.addr %s368, 8
        %s370 = scalar_lea.vmem %s0, %s369
        %p371 = pneg %p45
        %p372 = pneg %p42
        %p373 = scmp.lt.s32.totalorder %s24, 1
        %s374 = scalar_select %p373, %s24, 1
        %s375 = smul.addr %s374, 2
        %s376 = smul.addr %s375, 8
        %s377 = scalar_lea.vmem %s1, %s376
        %p378 = pneg %p71
        %p379 = pneg %p68
        %p380 = scmp.lt.s32.totalorder %s24, 1
        %s381 = scalar_select %p380, %s24, 1
        %s382 = scalar_lea.vmem %s2, %s381
        %p383 = pneg %p97
        %p384 = pneg %p94
        %p385 = pneg %p118
        %p386 = pneg %p115
        %p387 = pneg %p139
        %p388 = pneg %p136
        %p389 = pneg %p160
        %p390 = pneg %p157
        %p391 = pneg %p181
        %p392 = pneg %p178
        %p393 = pneg %p202
        %p394 = pneg %p199
        %p395 = pneg %p223
        %p396 = pneg %p220
        %p397 = pneg %p244
        %p398 = pneg %p241
        %p399 = scmp.lt.s32.totalorder %s24, 1
        %s400 = scalar_select %p399, %s24, 1
        %s401 = smul.addr %s400, 2
        %s402 = smul.addr %s401, 8
        %s403 = scalar_lea.vmem %s0, %s402
        %p404 = scmp.lt.s32.totalorder %s24, 1
        %s405 = scalar_select %p404, %s24, 1
        %s406 = smul.addr %s405, 2
        %s407 = smul.addr %s406, 8
        %s408 = scalar_lea.vmem %s1, %s407
        %p409 = scmp.lt.s32.totalorder %s24, 1
        %s410 = scalar_select %p409, %s24, 1
        %s411 = scalar_lea.vmem %s2, %s410
        %p412 = scmp.eq.s32.totalorder %s24, 0
        // Predicated region
        $region73: #{tpu_custom_call.1} parent=55 // pred_check
          %p413 = pneg %p412
        $region74: #{tpu_custom_call.1} parent=55 // pred_check_branch
          %415 = sbr.rel (%p413) target = $region76
        $region75: #{tpu_custom_call.1} parent=55 // pred_region
          %v416 = vld [vmem:[#allocation4] sm:$0xff]
          %v417 = vld [vmem:[#allocation4 + $0x8] sm:$0xff]
          %v418 = vld [vmem:[#allocation4 + $0x10] sm:$0xff]
          %v419 = vld [vmem:[#allocation4 + $0x18] sm:$0xff]
          %v420 = vld [vmem:[#allocation4 + $0x20] sm:$0xff]
          %v421 = vld [vmem:[#allocation4 + $0x28] sm:$0xff]
          %v422 = vld [vmem:[#allocation4 + $0x30] sm:$0xff]
          %v423 = vld [vmem:[#allocation4 + $0x38] sm:$0xff]
          %v424 = vld [vmem:[#allocation4 + $0x40] sm:$0xff]
          %v425 = vld [vmem:[#allocation4 + $0x48] sm:$0xff]
          %v426 = vld [vmem:[#allocation4 + $0x50] sm:$0xff]
          %v427 = vld [vmem:[#allocation4 + $0x58] sm:$0xff]
          %v428 = vld [vmem:[#allocation4 + $0x60] sm:$0xff]
          %v429 = vld [vmem:[#allocation4 + $0x68] sm:$0xff]
          %v430 = vld [vmem:[#allocation4 + $0x70] sm:$0xff]
          %v431 = vld [vmem:[#allocation4 + $0x78] sm:$0xff]
          %v432 = vld [vmem:[#allocation7] sm:$0xff]
          %v433 = vld [vmem:[#allocation7 + $0x8] sm:$0xff]
          %v434 = vld [vmem:[#allocation7 + $0x10] sm:$0xff]
          %v435 = vld [vmem:[#allocation7 + $0x18] sm:$0xff]
          %v436 = vld [vmem:[#allocation7 + $0x20] sm:$0xff]
          %v437 = vld [vmem:[#allocation7 + $0x28] sm:$0xff]
          %v438 = vld [vmem:[#allocation7 + $0x30] sm:$0xff]
          %v439 = vld [vmem:[#allocation7 + $0x38] sm:$0xff]
          %v440 = vld [vmem:[#allocation7 + $0x40] sm:$0xff]
          %v441 = vld [vmem:[#allocation7 + $0x48] sm:$0xff]
          %v442 = vld [vmem:[#allocation7 + $0x50] sm:$0xff]
          %v443 = vld [vmem:[#allocation7 + $0x58] sm:$0xff]
          %v444 = vld [vmem:[#allocation7 + $0x60] sm:$0xff]
          %v445 = vld [vmem:[#allocation7 + $0x68] sm:$0xff]
          %v446 = vld [vmem:[#allocation7 + $0x70] sm:$0xff]
          %v447 = vld [vmem:[#allocation7 + $0x78] sm:$0xff]
          %v448 = vld [vmem:[%s6] sm:$0x1]
          %v450 = vlaneseq
          %v451 = vshrl.u32 %v450, 7
          %v452 = vsub.s32 0, %v451
          %v453 = vrot.slane %v448, %v452
          %455 = vmatprep.subr.mxu0 0.0
          %456 = vmatpush1.msra.mxu0 %v447
          %457 = vmatprep.subr.mxu0 0.0
          %458 = vmatpush1.msra.mxu0 %v446
          %459 = vmatprep.subr.mxu0 0.0
          %460 = vmatpush1.msra.mxu0 %v445
          %461 = vmatprep.subr.mxu0 0.0
          %462 = vmatpush1.msra.mxu0 %v444
          %463 = vmatprep.subr.mxu0 0.0
          %464 = vmatpush1.msra.mxu0 %v443
          %465 = vmatprep.subr.mxu0 0.0
          %466 = vmatpush1.msra.mxu0 %v442
          %467 = vmatprep.subr.mxu0 0.0
          %468 = vmatpush1.msra.mxu0 %v441
          %469 = vmatprep.subr.mxu0 0.0
          %470 = vmatpush1.msra.mxu0 %v440
          %471 = vmatprep.subr.mxu0 0.0
          %472 = vmatpush1.msra.mxu0 %v439
          %473 = vmatprep.subr.mxu0 0.0
          %474 = vmatpush1.msra.mxu0 %v438
          %475 = vmatprep.subr.mxu0 0.0
          %476 = vmatpush1.msra.mxu0 %v437
          %477 = vmatprep.subr.mxu0 0.0
          %478 = vmatpush1.msra.mxu0 %v436
          %479 = vmatprep.subr.mxu0 0.0
          %480 = vmatpush1.msra.mxu0 %v435
          %481 = vmatprep.subr.mxu0 0.0
          %482 = vmatpush1.msra.mxu0 %v434
          %483 = vmatprep.subr.mxu0 0.0
          %484 = vmatpush1.msra.mxu0 %v433
          %485 = vmatprep.subr.mxu0 0.0
          %486 = vmatpush1.msra.mxu0 %v432
          %487 = vmatprep.subr.mxu0 0.0
          %488 = vmatpush2.msra.mxu0 0.0
          %489 = vmatprep.subr.mxu0 0.0
          %490 = vmatpush2.msra.mxu0 0.0
          %491 = vmatprep.subr.mxu0 0.0
          %492 = vmatpush2.msra.mxu0 0.0
          %493 = vmatprep.subr.mxu0 0.0
          %494 = vmatpush2.msra.mxu0 0.0
          %495 = vmatprep.subr.mxu0 0.0
          %496 = vmatpush2.msra.mxu0 0.0
          %497 = vmatprep.subr.mxu0 0.0
          %498 = vmatpush2.msra.mxu0 0.0
          %499 = vmatprep.subr.mxu0 0.0
          %500 = vmatpush2.msra.mxu0 0.0
          %501 = vmatprep.subr.mxu0 0.0
          %502 = vmatpush2.msra.mxu0 0.0
          %503 = vmatprep.subr.mxu0 0.0
          %504 = vmatpush2.msra.mxu0 0.0
          %505 = vmatprep.subr.mxu0 0.0
          %506 = vmatpush2.msra.mxu0 0.0
          %507 = vmatprep.subr.mxu0 0.0
          %508 = vmatpush2.msra.mxu0 0.0
          %509 = vmatprep.subr.mxu0 0.0
          %510 = vmatpush2.msra.mxu0 0.0
          %511 = vmatprep.subr.mxu0 0.0
          %512 = vmatpush2.msra.mxu0 0.0
          %513 = vmatprep.subr.mxu0 0.0
          %514 = vmatpush2.msra.mxu0 0.0
          %515 = vmatprep.subr.mxu0 0.0
          %516 = vmatpush2.msra.mxu0 0.0
          %517 = vmatprep.subr.mxu0 0.0
          %518 = vmatpush2.msra.mxu0 0.0
          %519 = vmatprep.mubr.f32.mxu0 0.0
          %520 = vmatmul.mubr.f32.gmra.mxu0 %v416
          %v521 = vpop.f32.mrf.mxu0
          %v522 = vadd.f32 %v453, %v521
          %v523 = vpop.f32.mrf.mxu0
          %524 = vmatprep.mubr.f32.mxu0 0.0
          %525 = vmatmul.mubr.f32.gmra.mxu0 %v417
          %v526 = vpop.f32.mrf.mxu0
          %v527 = vadd.f32 %v453, %v526
          %v528 = vpop.f32.mrf.mxu0
          %529 = vmatprep.mubr.f32.mxu0 0.0
          %530 = vmatmul.mubr.f32.gmra.mxu0 %v418
          %v531 = vpop.f32.mrf.mxu0
          %v532 = vadd.f32 %v453, %v531
          %v533 = vpop.f32.mrf.mxu0
          %534 = vmatprep.mubr.f32.mxu0 0.0
          %535 = vmatmul.mubr.f32.gmra.mxu0 %v419
          %v536 = vpop.f32.mrf.mxu0
          %v537 = vadd.f32 %v453, %v536
          %v538 = vpop.f32.mrf.mxu0
          %539 = vmatprep.mubr.f32.mxu0 0.0
          %540 = vmatmul.mubr.f32.gmra.mxu0 %v420
          %v541 = vpop.f32.mrf.mxu0
          %v542 = vadd.f32 %v453, %v541
          %v543 = vpop.f32.mrf.mxu0
          %544 = vmatprep.mubr.f32.mxu0 0.0
          %545 = vmatmul.mubr.f32.gmra.mxu0 %v421
          %v546 = vpop.f32.mrf.mxu0
          %v547 = vadd.f32 %v453, %v546
          %v548 = vpop.f32.mrf.mxu0
          %549 = vmatprep.mubr.f32.mxu0 0.0
          %550 = vmatmul.mubr.f32.gmra.mxu0 %v422
          %v551 = vpop.f32.mrf.mxu0
          %v552 = vadd.f32 %v453, %v551
          %v553 = vpop.f32.mrf.mxu0
          %554 = vmatprep.mubr.f32.mxu0 0.0
          %555 = vmatmul.mubr.f32.gmra.mxu0 %v423
          %v556 = vpop.f32.mrf.mxu0
          %v557 = vadd.f32 %v453, %v556
          %v558 = vpop.f32.mrf.mxu0
          %559 = vmatprep.mubr.f32.mxu0 0.0
          %560 = vmatmul.mubr.f32.gmra.mxu0 %v424
          %v561 = vpop.f32.mrf.mxu0
          %v562 = vadd.f32 %v453, %v561
          %v563 = vpop.f32.mrf.mxu0
          %564 = vmatprep.mubr.f32.mxu0 0.0
          %565 = vmatmul.mubr.f32.gmra.mxu0 %v425
          %v566 = vpop.f32.mrf.mxu0
          %v567 = vadd.f32 %v453, %v566
          %v568 = vpop.f32.mrf.mxu0
          %569 = vmatprep.mubr.f32.mxu0 0.0
          %570 = vmatmul.mubr.f32.gmra.mxu0 %v426
          %v571 = vpop.f32.mrf.mxu0
          %v572 = vadd.f32 %v453, %v571
          %v573 = vpop.f32.mrf.mxu0
          %574 = vmatprep.mubr.f32.mxu0 0.0
          %575 = vmatmul.mubr.f32.gmra.mxu0 %v427
          %v576 = vpop.f32.mrf.mxu0
          %v577 = vadd.f32 %v453, %v576
          %v578 = vpop.f32.mrf.mxu0
          %579 = vmatprep.mubr.f32.mxu0 0.0
          %580 = vmatmul.mubr.f32.gmra.mxu0 %v428
          %v581 = vpop.f32.mrf.mxu0
          %v582 = vadd.f32 %v453, %v581
          %v583 = vpop.f32.mrf.mxu0
          %584 = vmatprep.mubr.f32.mxu0 0.0
          %585 = vmatmul.mubr.f32.gmra.mxu0 %v429
          %v586 = vpop.f32.mrf.mxu0
          %v587 = vadd.f32 %v453, %v586
          %v588 = vpop.f32.mrf.mxu0
          %589 = vmatprep.mubr.f32.mxu0 0.0
          %590 = vmatmul.mubr.f32.gmra.mxu0 %v430
          %v591 = vpop.f32.mrf.mxu0
          %v592 = vadd.f32 %v453, %v591
          %v593 = vpop.f32.mrf.mxu0
          %594 = vmatprep.mubr.f32.mxu0 0.0
          %595 = vmatmul.mubr.f32.gmra.mxu0 %v431
          %v596 = vpop.f32.mrf.mxu0
          %v597 = vadd.f32 %v453, %v596
          %v598 = vpop.f32.mrf.mxu0
          %599 = vdwg.mxu0
          %600 = vst [vmem:[#allocation2] sm:$0xff] %v522
          %601 = vst [vmem:[#allocation2 + $0x8] sm:$0xff] %v527
          %602 = vst [vmem:[#allocation2 + $0x10] sm:$0xff] %v532
          %603 = vst [vmem:[#allocation2 + $0x18] sm:$0xff] %v537
          %604 = vst [vmem:[#allocation2 + $0x20] sm:$0xff] %v542
          %605 = vst [vmem:[#allocation2 + $0x28] sm:$0xff] %v547
          %606 = vst [vmem:[#allocation2 + $0x30] sm:$0xff] %v552
          %607 = vst [vmem:[#allocation2 + $0x38] sm:$0xff] %v557
          %608 = vst [vmem:[#allocation2 + $0x40] sm:$0xff] %v562
          %609 = vst [vmem:[#allocation2 + $0x48] sm:$0xff] %v567
          %610 = vst [vmem:[#allocation2 + $0x50] sm:$0xff] %v572
          %611 = vst [vmem:[#allocation2 + $0x58] sm:$0xff] %v577
          %612 = vst [vmem:[#allocation2 + $0x60] sm:$0xff] %v582
          %613 = vst [vmem:[#allocation2 + $0x68] sm:$0xff] %v587
          %614 = vst [vmem:[#allocation2 + $0x70] sm:$0xff] %v592
          %615 = vst [vmem:[#allocation2 + $0x78] sm:$0xff] %v597
          %v616 = vld [vmem:[#allocation9] sm:$0xff]
          %v617 = vld [vmem:[#allocation9 + $0x8] sm:$0xff]
          %v618 = vld [vmem:[#allocation9 + $0x10] sm:$0xff]
          %v619 = vld [vmem:[#allocation9 + $0x18] sm:$0xff]
          %v620 = vld [vmem:[#allocation9 + $0x20] sm:$0xff]
          %v621 = vld [vmem:[#allocation9 + $0x28] sm:$0xff]
          %v622 = vld [vmem:[#allocation9 + $0x30] sm:$0xff]
          %v623 = vld [vmem:[#allocation9 + $0x38] sm:$0xff]
          %v624 = vld [vmem:[#allocation9 + $0x40] sm:$0xff]
          %v625 = vld [vmem:[#allocation9 + $0x48] sm:$0xff]
          %v626 = vld [vmem:[#allocation9 + $0x50] sm:$0xff]
          %v627 = vld [vmem:[#allocation9 + $0x58] sm:$0xff]
          %v628 = vld [vmem:[#allocation9 + $0x60] sm:$0xff]
          %v629 = vld [vmem:[#allocation9 + $0x68] sm:$0xff]
          %v630 = vld [vmem:[#allocation9 + $0x70] sm:$0xff]
          %v631 = vld [vmem:[#allocation9 + $0x78] sm:$0xff]
          %632 = vmatprep.subr.mxu0 0.0
          %633 = vmatpush1.msra.mxu0 %v631
          %634 = vmatprep.subr.mxu0 0.0
          %635 = vmatpush1.msra.mxu0 %v630
          %636 = vmatprep.subr.mxu0 0.0
          %637 = vmatpush1.msra.mxu0 %v629
          %638 = vmatprep.subr.mxu0 0.0
          %639 = vmatpush1.msra.mxu0 %v628
          %640 = vmatprep.subr.mxu0 0.0
          %641 = vmatpush1.msra.mxu0 %v627
          %642 = vmatprep.subr.mxu0 0.0
          %643 = vmatpush1.msra.mxu0 %v626
          %644 = vmatprep.subr.mxu0 0.0
          %645 = vmatpush1.msra.mxu0 %v625
          %646 = vmatprep.subr.mxu0 0.0
          %647 = vmatpush1.msra.mxu0 %v624
          %648 = vmatprep.subr.mxu0 0.0
          %649 = vmatpush1.msra.mxu0 %v623
          %650 = vmatprep.subr.mxu0 0.0
          %651 = vmatpush1.msra.mxu0 %v622
          %652 = vmatprep.subr.mxu0 0.0
          %653 = vmatpush1.msra.mxu0 %v621
          %654 = vmatprep.subr.mxu0 0.0
          %655 = vmatpush1.msra.mxu0 %v620
          %656 = vmatprep.subr.mxu0 0.0
          %657 = vmatpush1.msra.mxu0 %v619
          %658 = vmatprep.subr.mxu0 0.0
          %659 = vmatpush1.msra.mxu0 %v618
          %660 = vmatprep.subr.mxu0 0.0
          %661 = vmatpush1.msra.mxu0 %v617
          %662 = vmatprep.subr.mxu0 0.0
          %663 = vmatpush1.msra.mxu0 %v616
          %664 = vmatprep.subr.mxu0 0.0
          %665 = vmatpush2.msra.mxu0 0.0
          %666 = vmatprep.subr.mxu0 0.0
          %667 = vmatpush2.msra.mxu0 0.0
          %668 = vmatprep.subr.mxu0 0.0
          %669 = vmatpush2.msra.mxu0 0.0
          %670 = vmatprep.subr.mxu0 0.0
          %671 = vmatpush2.msra.mxu0 0.0
          %672 = vmatprep.subr.mxu0 0.0
          %673 = vmatpush2.msra.mxu0 0.0
          %674 = vmatprep.subr.mxu0 0.0
          %675 = vmatpush2.msra.mxu0 0.0
          %676 = vmatprep.subr.mxu0 0.0
          %677 = vmatpush2.msra.mxu0 0.0
          %678 = vmatprep.subr.mxu0 0.0
          %679 = vmatpush2.msra.mxu0 0.0
          %680 = vmatprep.subr.mxu0 0.0
          %681 = vmatpush2.msra.mxu0 0.0
          %682 = vmatprep.subr.mxu0 0.0
          %683 = vmatpush2.msra.mxu0 0.0
          %684 = vmatprep.subr.mxu0 0.0
          %685 = vmatpush2.msra.mxu0 0.0
          %686 = vmatprep.subr.mxu0 0.0
          %687 = vmatpush2.msra.mxu0 0.0
          %688 = vmatprep.subr.mxu0 0.0
          %689 = vmatpush2.msra.mxu0 0.0
          %690 = vmatprep.subr.mxu0 0.0
          %691 = vmatpush2.msra.mxu0 0.0
          %692 = vmatprep.subr.mxu0 0.0
          %693 = vmatpush2.msra.mxu0 0.0
          %694 = vmatprep.subr.mxu0 0.0
          %695 = vmatpush2.msra.mxu0 0.0
          %696 = vmatprep.mubr.f32.mxu0 0.0
          %697 = vmatmul.mubr.f32.gmra.mxu0 %v416
          %v698 = vpop.f32.mrf.mxu0
          %v699 = vadd.f32 0.0, %v698
          %v700 = vpop.f32.mrf.mxu0
          %701 = vmatprep.mubr.f32.mxu0 0.0
          %702 = vmatmul.mubr.f32.gmra.mxu0 %v417
          %v703 = vpop.f32.mrf.mxu0
          %v704 = vadd.f32 0.0, %v703
          %v705 = vpop.f32.mrf.mxu0
          %706 = vmatprep.mubr.f32.mxu0 0.0
          %707 = vmatmul.mubr.f32.gmra.mxu0 %v418
          %v708 = vpop.f32.mrf.mxu0
          %v709 = vadd.f32 0.0, %v708
          %v710 = vpop.f32.mrf.mxu0
          %711 = vmatprep.mubr.f32.mxu0 0.0
          %712 = vmatmul.mubr.f32.gmra.mxu0 %v419
          %v713 = vpop.f32.mrf.mxu0
          %v714 = vadd.f32 0.0, %v713
          %v715 = vpop.f32.mrf.mxu0
          %716 = vmatprep.mubr.f32.mxu0 0.0
          %717 = vmatmul.mubr.f32.gmra.mxu0 %v420
          %v718 = vpop.f32.mrf.mxu0
          %v719 = vadd.f32 0.0, %v718
          %v720 = vpop.f32.mrf.mxu0
          %721 = vmatprep.mubr.f32.mxu0 0.0
          %722 = vmatmul.mubr.f32.gmra.mxu0 %v421
          %v723 = vpop.f32.mrf.mxu0
          %v724 = vadd.f32 0.0, %v723
          %v725 = vpop.f32.mrf.mxu0
          %726 = vmatprep.mubr.f32.mxu0 0.0
          %727 = vmatmul.mubr.f32.gmra.mxu0 %v422
          %v728 = vpop.f32.mrf.mxu0
          %v729 = vadd.f32 0.0, %v728
          %v730 = vpop.f32.mrf.mxu0
          %731 = vmatprep.mubr.f32.mxu0 0.0
          %732 = vmatmul.mubr.f32.gmra.mxu0 %v423
          %v733 = vpop.f32.mrf.mxu0
          %v734 = vadd.f32 0.0, %v733
          %v735 = vpop.f32.mrf.mxu0
          %736 = vmatprep.mubr.f32.mxu0 0.0
          %737 = vmatmul.mubr.f32.gmra.mxu0 %v424
          %v738 = vpop.f32.mrf.mxu0
          %v739 = vadd.f32 0.0, %v738
          %v740 = vpop.f32.mrf.mxu0
          %741 = vmatprep.mubr.f32.mxu0 0.0
          %742 = vmatmul.mubr.f32.gmra.mxu0 %v425
          %v743 = vpop.f32.mrf.mxu0
          %v744 = vadd.f32 0.0, %v743
          %v745 = vpop.f32.mrf.mxu0
          %746 = vmatprep.mubr.f32.mxu0 0.0
          %747 = vmatmul.mubr.f32.gmra.mxu0 %v426
          %v748 = vpop.f32.mrf.mxu0
          %v749 = vadd.f32 0.0, %v748
          %v750 = vpop.f32.mrf.mxu0
          %751 = vmatprep.mubr.f32.mxu0 0.0
          %752 = vmatmul.mubr.f32.gmra.mxu0 %v427
          %v753 = vpop.f32.mrf.mxu0
          %v754 = vadd.f32 0.0, %v753
          %v755 = vpop.f32.mrf.mxu0
          %756 = vmatprep.mubr.f32.mxu0 0.0
          %757 = vmatmul.mubr.f32.gmra.mxu0 %v428
          %v758 = vpop.f32.mrf.mxu0
          %v759 = vadd.f32 0.0, %v758
          %v760 = vpop.f32.mrf.mxu0
          %761 = vmatprep.mubr.f32.mxu0 0.0
          %762 = vmatmul.mubr.f32.gmra.mxu0 %v429
          %v763 = vpop.f32.mrf.mxu0
          %v764 = vadd.f32 0.0, %v763
          %v765 = vpop.f32.mrf.mxu0
          %766 = vmatprep.mubr.f32.mxu0 0.0
          %767 = vmatmul.mubr.f32.gmra.mxu0 %v430
          %v768 = vpop.f32.mrf.mxu0
          %v769 = vadd.f32 0.0, %v768
          %v770 = vpop.f32.mrf.mxu0
          %771 = vmatprep.mubr.f32.mxu0 0.0
          %772 = vmatmul.mubr.f32.gmra.mxu0 %v431
          %v773 = vpop.f32.mrf.mxu0
          %v774 = vadd.f32 0.0, %v773
          %v775 = vpop.f32.mrf.mxu0
          %776 = vdwg.mxu0
          %777 = vst [vmem:[#allocation3] sm:$0xff] %v699
          %778 = vst [vmem:[#allocation3 + $0x8] sm:$0xff] %v704
          %779 = vst [vmem:[#allocation3 + $0x10] sm:$0xff] %v709
          %780 = vst [vmem:[#allocation3 + $0x18] sm:$0xff] %v714
          %781 = vst [vmem:[#allocation3 + $0x20] sm:$0xff] %v719
          %782 = vst [vmem:[#allocation3 + $0x28] sm:$0xff] %v724
          %783 = vst [vmem:[#allocation3 + $0x30] sm:$0xff] %v729
          %784 = vst [vmem:[#allocation3 + $0x38] sm:$0xff] %v734
          %785 = vst [vmem:[#allocation3 + $0x40] sm:$0xff] %v739
          %786 = vst [vmem:[#allocation3 + $0x48] sm:$0xff] %v744
          %787 = vst [vmem:[#allocation3 + $0x50] sm:$0xff] %v749
          %788 = vst [vmem:[#allocation3 + $0x58] sm:$0xff] %v754
          %789 = vst [vmem:[#allocation3 + $0x60] sm:$0xff] %v759
          %790 = vst [vmem:[#allocation3 + $0x68] sm:$0xff] %v764
          %791 = vst [vmem:[#allocation3 + $0x70] sm:$0xff] %v769
          %792 = vst [vmem:[#allocation3 + $0x78] sm:$0xff] %v774
          %793 = vst [vmem:[#allocation12] sm:$0xff] 0.0
          %794 = vst [vmem:[#allocation12 + $0x8] sm:$0xff] 0.0
          %795 = vst [vmem:[#allocation12 + $0x10] sm:$0xff] 0.0
          %796 = vst [vmem:[#allocation12 + $0x18] sm:$0xff] 0.0
          %797 = vst [vmem:[#allocation12 + $0x20] sm:$0xff] 0.0
          %798 = vst [vmem:[#allocation12 + $0x28] sm:$0xff] 0.0
          %799 = vst [vmem:[#allocation12 + $0x30] sm:$0xff] 0.0
          %800 = vst [vmem:[#allocation12 + $0x38] sm:$0xff] 0.0
          %801 = vst [vmem:[#allocation12 + $0x40] sm:$0xff] 0.0
          %802 = vst [vmem:[#allocation12 + $0x48] sm:$0xff] 0.0
          %803 = vst [vmem:[#allocation12 + $0x50] sm:$0xff] 0.0
          %804 = vst [vmem:[#allocation12 + $0x58] sm:$0xff] 0.0
          %805 = vst [vmem:[#allocation12 + $0x60] sm:$0xff] 0.0
          %806 = vst [vmem:[#allocation12 + $0x68] sm:$0xff] 0.0
          %807 = vst [vmem:[#allocation12 + $0x70] sm:$0xff] 0.0
          %808 = vst [vmem:[#allocation12 + $0x78] sm:$0xff] 0.0
        $region76: #{tpu_custom_call.1} parent=55 // pred_fallthru
          _
        %v809 = vld [vmem:[%s403] sm:$0xff]
        %v810 = vld [vmem:[%s403 + $0x8] sm:$0xff]
        %v811 = vld [vmem:[%s408] sm:$0xff]
        %v812 = vld [vmem:[%s408 + $0x8] sm:$0xff]
        %v813 = vld [vmem:[%s411] sm:$0x1]
        %v814 = vlaneseq
        %v815 = vand.u32 %v814, 127
        %v816 = vstv 0
        %v817 = vadd.s32 %v815, %v816
        %818 = vset.pattern.permute.xlu0 0
        %819 = vperm.xlu0 %818, %v811
        %v820 = vpop.permute.xlu0 %819
        %821 = vset.pattern.permute.xlu0 0
        %822 = vperm.xlu0 %821, %v812
        %v823 = vpop.permute.xlu0 %822
        %vm824 = vcmp.eq.s32.totalorder %v817, %v820
        %vm825 = vcmp.eq.s32.totalorder %v817, %v823
        %v826 = vsel %vm824, 1, 0
        %v827 = vsel %vm825, 1, 0
        %v828 = vcvt.s32.f32 %v826
        %v829 = vcvt.s32.f32 %v827
        %v830 = vpack.c.bf16 %v829, %v828
        %831 = vset.pattern.permute.xlu0 0
        %832 = vperm.xlu0 %831, %v809
        %v833 = vpop.permute.xlu0 %832
        %834 = vset.pattern.permute.xlu0 0
        %835 = vperm.xlu0 %834, %v810
        %v836 = vpop.permute.xlu0 %835
        %vm837 = vcmp.eq.s32.totalorder %v817, %v833
        %vm838 = vcmp.eq.s32.totalorder %v817, %v836
        %v839 = vsel %vm837, 1, 0
        %v840 = vsel %vm838, 1, 0
        %v841 = vcvt.s32.f32 %v839
        %v842 = vcvt.s32.f32 %v840
        %v843 = vpack.c.bf16 %v842, %v841
        %v844 = vld [vmem:[#allocation2] sm:$0xff]
        %v845 = vld [vmem:[#allocation2 + $0x8] sm:$0xff]
        %v846 = vld [vmem:[#allocation2 + $0x10] sm:$0xff]
        %v847 = vld [vmem:[#allocation2 + $0x18] sm:$0xff]
        %v848 = vld [vmem:[#allocation2 + $0x20] sm:$0xff]
        %v849 = vld [vmem:[#allocation2 + $0x28] sm:$0xff]
        %v850 = vld [vmem:[#allocation2 + $0x30] sm:$0xff]
        %v851 = vld [vmem:[#allocation2 + $0x38] sm:$0xff]
        %v852 = vld [vmem:[#allocation2 + $0x40] sm:$0xff]
        %v853 = vld [vmem:[#allocation2 + $0x48] sm:$0xff]
        %v854 = vld [vmem:[#allocation2 + $0x50] sm:$0xff]
        %v855 = vld [vmem:[#allocation2 + $0x58] sm:$0xff]
        %v856 = vld [vmem:[#allocation2 + $0x60] sm:$0xff]
        %v857 = vld [vmem:[#allocation2 + $0x68] sm:$0xff]
        %v858 = vld [vmem:[#allocation2 + $0x70] sm:$0xff]
        %v859 = vld [vmem:[#allocation2 + $0x78] sm:$0xff]
        %v860 = vld [vmem:[#allocation3] sm:$0xff]
        %v861 = vld [vmem:[#allocation3 + $0x8] sm:$0xff]
        %v862 = vld [vmem:[#allocation3 + $0x10] sm:$0xff]
        %v863 = vld [vmem:[#allocation3 + $0x18] sm:$0xff]
        %v864 = vld [vmem:[#allocation3 + $0x20] sm:$0xff]
        %v865 = vld [vmem:[#allocation3 + $0x28] sm:$0xff]
        %v866 = vld [vmem:[#allocation3 + $0x30] sm:$0xff]
        %v867 = vld [vmem:[#allocation3 + $0x38] sm:$0xff]
        %v868 = vld [vmem:[#allocation3 + $0x40] sm:$0xff]
        %v869 = vld [vmem:[#allocation3 + $0x48] sm:$0xff]
        %v870 = vld [vmem:[#allocation3 + $0x50] sm:$0xff]
        %v871 = vld [vmem:[#allocation3 + $0x58] sm:$0xff]
        %v872 = vld [vmem:[#allocation3 + $0x60] sm:$0xff]
        %v873 = vld [vmem:[#allocation3 + $0x68] sm:$0xff]
        %v874 = vld [vmem:[#allocation3 + $0x70] sm:$0xff]
        %v875 = vld [vmem:[#allocation3 + $0x78] sm:$0xff]
        %v876 = vunpack.c.l.bf16 %v830
        %v877 = vunpack.c.h.bf16 %v830
        %v878 = vunpack.c.l.bf16 %v843
        %v879 = vunpack.c.h.bf16 %v843
        %880 = vmatprep.subr.mxu0 0.0
        %881 = vmatpush1.msra.mxu0 %v875
        %882 = vmatprep.subr.mxu0 0.0
        %883 = vmatpush1.msra.mxu0 %v874
        %884 = vmatprep.subr.mxu0 0.0
        %885 = vmatpush1.msra.mxu0 %v873
        %886 = vmatprep.subr.mxu0 0.0
        %887 = vmatpush1.msra.mxu0 %v872
        %888 = vmatprep.subr.mxu0 0.0
        %889 = vmatpush1.msra.mxu0 %v871
        %890 = vmatprep.subr.mxu0 0.0
        %891 = vmatpush1.msra.mxu0 %v870
        %892 = vmatprep.subr.mxu0 0.0
        %893 = vmatpush1.msra.mxu0 %v869
        %894 = vmatprep.subr.mxu0 0.0
        %895 = vmatpush1.msra.mxu0 %v868
        %896 = vmatprep.subr.mxu0 0.0
        %897 = vmatpush1.msra.mxu0 %v867
        %898 = vmatprep.subr.mxu0 0.0
        %899 = vmatpush1.msra.mxu0 %v866
        %900 = vmatprep.subr.mxu0 0.0
        %901 = vmatpush1.msra.mxu0 %v865
        %902 = vmatprep.subr.mxu0 0.0
        %903 = vmatpush1.msra.mxu0 %v864
        %904 = vmatprep.subr.mxu0 0.0
        %905 = vmatpush1.msra.mxu0 %v863
        %906 = vmatprep.subr.mxu0 0.0
        %907 = vmatpush1.msra.mxu0 %v862
        %908 = vmatprep.subr.mxu0 0.0
        %909 = vmatpush1.msra.mxu0 %v861
        %910 = vmatprep.subr.mxu0 0.0
        %911 = vmatpush1.msra.mxu0 %v860
        %912 = vmatprep.subr.mxu0 0.0
        %913 = vmatpush2.msra.mxu0 0.0
        %914 = vmatprep.subr.mxu0 0.0
        %915 = vmatpush2.msra.mxu0 0.0
        %916 = vmatprep.subr.mxu0 0.0
        %917 = vmatpush2.msra.mxu0 0.0
        %918 = vmatprep.subr.mxu0 0.0
        %919 = vmatpush2.msra.mxu0 0.0
        %920 = vmatprep.subr.mxu0 0.0
        %921 = vmatpush2.msra.mxu0 0.0
        %922 = vmatprep.subr.mxu0 0.0
        %923 = vmatpush2.msra.mxu0 0.0
        %924 = vmatprep.subr.mxu0 0.0
        %925 = vmatpush2.msra.mxu0 0.0
        %926 = vmatprep.subr.mxu0 0.0
        %927 = vmatpush2.msra.mxu0 0.0
        %928 = vmatprep.subr.mxu0 0.0
        %929 = vmatpush2.msra.mxu0 0.0
        %930 = vmatprep.subr.mxu0 0.0
        %931 = vmatpush2.msra.mxu0 0.0
        %932 = vmatprep.subr.mxu0 0.0
        %933 = vmatpush2.msra.mxu0 0.0
        %934 = vmatprep.subr.mxu0 0.0
        %935 = vmatpush2.msra.mxu0 0.0
        %936 = vmatprep.subr.mxu0 0.0
        %937 = vmatpush2.msra.mxu0 0.0
        %938 = vmatprep.subr.mxu0 0.0
        %939 = vmatpush2.msra.mxu0 0.0
        %940 = vmatprep.subr.mxu0 0.0
        %941 = vmatpush2.msra.mxu0 0.0
        %942 = vmatprep.subr.mxu0 0.0
        %943 = vmatpush2.msra.mxu0 0.0
        %944 = vmatprep.mubr.f32.mxu0 0.0
        %945 = vmatmul.mubr.f32.gmra.mxu0 %v878
        %v946 = vpop.f32.mrf.mxu0
        %v947 = vadd.f32 0.0, %v946
        %v948 = vpop.f32.mrf.mxu0
        %949 = vmatprep.mubr.f32.mxu0 0.0
        %950 = vmatmul.mubr.f32.gmra.mxu0 %v879
        %v951 = vpop.f32.mrf.mxu0
        %v952 = vadd.f32 0.0, %v951
        %v953 = vpop.f32.mrf.mxu0
        %954 = vdwg.mxu0
        %955 = vmatprep.subr.mxu0 0.0
        %956 = vmatpush1.msra.mxu0 %v859
        %957 = vmatprep.subr.mxu0 0.0
        %958 = vmatpush1.msra.mxu0 %v858
        %959 = vmatprep.subr.mxu0 0.0
        %960 = vmatpush1.msra.mxu0 %v857
        %961 = vmatprep.subr.mxu0 0.0
        %962 = vmatpush1.msra.mxu0 %v856
        %963 = vmatprep.subr.mxu0 0.0
        %964 = vmatpush1.msra.mxu0 %v855
        %965 = vmatprep.subr.mxu0 0.0
        %966 = vmatpush1.msra.mxu0 %v854
        %967 = vmatprep.subr.mxu0 0.0
        %968 = vmatpush1.msra.mxu0 %v853
        %969 = vmatprep.subr.mxu0 0.0
        %970 = vmatpush1.msra.mxu0 %v852
        %971 = vmatprep.subr.mxu0 0.0
        %972 = vmatpush1.msra.mxu0 %v851
        %973 = vmatprep.subr.mxu0 0.0
        %974 = vmatpush1.msra.mxu0 %v850
        %975 = vmatprep.subr.mxu0 0.0
        %976 = vmatpush1.msra.mxu0 %v849
        %977 = vmatprep.subr.mxu0 0.0
        %978 = vmatpush1.msra.mxu0 %v848
        %979 = vmatprep.subr.mxu0 0.0
        %980 = vmatpush1.msra.mxu0 %v847
        %981 = vmatprep.subr.mxu0 0.0
        %982 = vmatpush1.msra.mxu0 %v846
        %983 = vmatprep.subr.mxu0 0.0
        %984 = vmatpush1.msra.mxu0 %v845
        %985 = vmatprep.subr.mxu0 0.0
        %986 = vmatpush1.msra.mxu0 %v844
        %987 = vmatprep.subr.mxu0 0.0
        %988 = vmatpush2.msra.mxu0 0.0
        %989 = vmatprep.subr.mxu0 0.0
        %990 = vmatpush2.msra.mxu0 0.0
        %991 = vmatprep.subr.mxu0 0.0
        %992 = vmatpush2.msra.mxu0 0.0
        %993 = vmatprep.subr.mxu0 0.0
        %994 = vmatpush2.msra.mxu0 0.0
        %995 = vmatprep.subr.mxu0 0.0
        %996 = vmatpush2.msra.mxu0 0.0
        %997 = vmatprep.subr.mxu0 0.0
        %998 = vmatpush2.msra.mxu0 0.0
        %999 = vmatprep.subr.mxu0 0.0
        %1000 = vmatpush2.msra.mxu0 0.0
        %1001 = vmatprep.subr.mxu0 0.0
        %1002 = vmatpush2.msra.mxu0 0.0
        %1003 = vmatprep.subr.mxu0 0.0
        %1004 = vmatpush2.msra.mxu0 0.0
        %1005 = vmatprep.subr.mxu0 0.0
        %1006 = vmatpush2.msra.mxu0 0.0
        %1007 = vmatprep.subr.mxu0 0.0
        %1008 = vmatpush2.msra.mxu0 0.0
        %1009 = vmatprep.subr.mxu0 0.0
        %1010 = vmatpush2.msra.mxu0 0.0
        %1011 = vmatprep.subr.mxu0 0.0
        %1012 = vmatpush2.msra.mxu0 0.0
        %1013 = vmatprep.subr.mxu0 0.0
        %1014 = vmatpush2.msra.mxu0 0.0
        %1015 = vmatprep.subr.mxu0 0.0
        %1016 = vmatpush2.msra.mxu0 0.0
        %1017 = vmatprep.subr.mxu0 0.0
        %1018 = vmatpush2.msra.mxu0 0.0
        %1019 = vmatprep.mubr.f32.mxu0 0.0
        %1020 = vmatmul.mubr.f32.gmra.mxu0 %v876
        %v1021 = vpop.f32.mrf.mxu0
        %v1022 = vadd.f32 %v947, %v1021
        %v1023 = vpop.f32.mrf.mxu0
        %1024 = vmatprep.mubr.f32.mxu0 0.0
        %1025 = vmatmul.mubr.f32.gmra.mxu0 %v877
        %v1026 = vpop.f32.mrf.mxu0
        %v1027 = vadd.f32 %v952, %v1026
        %v1028 = vpop.f32.mrf.mxu0
        %1029 = vdwg.mxu0
        %v1030 = vmax.f32 %v1022, 0.0
        %v1031 = vmax.f32 %v1027, 0.0
        %v1032 = vld [vmem:[#allocation10] sm:$0xff]
        %v1033 = vld [vmem:[#allocation10 + $0x8] sm:$0xff]
        %v1034 = vld [vmem:[#allocation10 + $0x10] sm:$0xff]
        %v1035 = vld [vmem:[#allocation10 + $0x18] sm:$0xff]
        %v1036 = vld [vmem:[#allocation10 + $0x20] sm:$0xff]
        %v1037 = vld [vmem:[#allocation10 + $0x28] sm:$0xff]
        %v1038 = vld [vmem:[#allocation10 + $0x30] sm:$0xff]
        %v1039 = vld [vmem:[#allocation10 + $0x38] sm:$0xff]
        %v1040 = vld [vmem:[#allocation10 + $0x40] sm:$0xff]
        %v1041 = vld [vmem:[#allocation10 + $0x48] sm:$0xff]
        %v1042 = vld [vmem:[#allocation10 + $0x50] sm:$0xff]
        %v1043 = vld [vmem:[#allocation10 + $0x58] sm:$0xff]
        %v1044 = vld [vmem:[#allocation10 + $0x60] sm:$0xff]
        %v1045 = vld [vmem:[#allocation10 + $0x68] sm:$0xff]
        %v1046 = vld [vmem:[#allocation10 + $0x70] sm:$0xff]
        %v1047 = vld [vmem:[#allocation10 + $0x78] sm:$0xff]
        %v1048 = vld [vmem:[%s8] sm:$0x1]
        %v1050 = vlaneseq
        %v1051 = vshrl.u32 %v1050, 7
        %v1052 = vsub.s32 0, %v1051
        %v1053 = vrot.slane %v1048, %v1052
        %1055 = vmatprep.subr.mxu0 0.0
        %1056 = vmatpush1.msra.mxu0 %v1047
        %1057 = vmatprep.subr.mxu0 0.0
        %1058 = vmatpush1.msra.mxu0 %v1046
        %1059 = vmatprep.subr.mxu0 0.0
        %1060 = vmatpush1.msra.mxu0 %v1045
        %1061 = vmatprep.subr.mxu0 0.0
        %1062 = vmatpush1.msra.mxu0 %v1044
        %1063 = vmatprep.subr.mxu0 0.0
        %1064 = vmatpush1.msra.mxu0 %v1043
        %1065 = vmatprep.subr.mxu0 0.0
        %1066 = vmatpush1.msra.mxu0 %v1042
        %1067 = vmatprep.subr.mxu0 0.0
        %1068 = vmatpush1.msra.mxu0 %v1041
        %1069 = vmatprep.subr.mxu0 0.0
        %1070 = vmatpush1.msra.mxu0 %v1040
        %1071 = vmatprep.subr.mxu0 0.0
        %1072 = vmatpush1.msra.mxu0 %v1039
        %1073 = vmatprep.subr.mxu0 0.0
        %1074 = vmatpush1.msra.mxu0 %v1038
        %1075 = vmatprep.subr.mxu0 0.0
        %1076 = vmatpush1.msra.mxu0 %v1037
        %1077 = vmatprep.subr.mxu0 0.0
        %1078 = vmatpush1.msra.mxu0 %v1036
        %1079 = vmatprep.subr.mxu0 0.0
        %1080 = vmatpush1.msra.mxu0 %v1035
        %1081 = vmatprep.subr.mxu0 0.0
        %1082 = vmatpush1.msra.mxu0 %v1034
        %1083 = vmatprep.subr.mxu0 0.0
        %1084 = vmatpush1.msra.mxu0 %v1033
        %1085 = vmatprep.subr.mxu0 0.0
        %1086 = vmatpush1.msra.mxu0 %v1032
        %1087 = vmatprep.subr.mxu0 0.0
        %1088 = vmatpush2.msra.mxu0 0.0
        %1089 = vmatprep.subr.mxu0 0.0
        %1090 = vmatpush2.msra.mxu0 0.0
        %1091 = vmatprep.subr.mxu0 0.0
        %1092 = vmatpush2.msra.mxu0 0.0
        %1093 = vmatprep.subr.mxu0 0.0
        %1094 = vmatpush2.msra.mxu0 0.0
        %1095 = vmatprep.subr.mxu0 0.0
        %1096 = vmatpush2.msra.mxu0 0.0
        %1097 = vmatprep.subr.mxu0 0.0
        %1098 = vmatpush2.msra.mxu0 0.0
        %1099 = vmatprep.subr.mxu0 0.0
        %1100 = vmatpush2.msra.mxu0 0.0
        %1101 = vmatprep.subr.mxu0 0.0
        %1102 = vmatpush2.msra.mxu0 0.0
        %1103 = vmatprep.subr.mxu0 0.0
        %1104 = vmatpush2.msra.mxu0 0.0
        %1105 = vmatprep.subr.mxu0 0.0
        %1106 = vmatpush2.msra.mxu0 0.0
        %1107 = vmatprep.subr.mxu0 0.0
        %1108 = vmatpush2.msra.mxu0 0.0
        %1109 = vmatprep.subr.mxu0 0.0
        %1110 = vmatpush2.msra.mxu0 0.0
        %1111 = vmatprep.subr.mxu0 0.0
        %1112 = vmatpush2.msra.mxu0 0.0
        %1113 = vmatprep.subr.mxu0 0.0
        %1114 = vmatpush2.msra.mxu0 0.0
        %1115 = vmatprep.subr.mxu0 0.0
        %1116 = vmatpush2.msra.mxu0 0.0
        %1117 = vmatprep.subr.mxu0 0.0
        %1118 = vmatpush2.msra.mxu0 0.0
        %1119 = vmatprep.mubr.f32.mxu0 0.0
        %1120 = vmatmul.mubr.f32.gmra.mxu0 %v1030
        %v1121 = vpop.f32.mrf.mxu0
        %v1122 = vadd.f32 %v1053, %v1121
        %v1123 = vpop.f32.mrf.mxu0
        %1124 = vmatprep.mubr.f32.mxu0 0.0
        %1125 = vmatmul.mubr.f32.gmra.mxu0 %v1031
        %v1126 = vpop.f32.mrf.mxu0
        %v1127 = vadd.f32 %v1053, %v1126
        %v1128 = vpop.f32.mrf.mxu0
        %1129 = vdwg.mxu0
        %v1130 = vlaneseq
        %v1131 = vshrl.u32 %v1130, 7
        %v1132 = vadd.s32 %v1131, 8
        %v1133 = vadd.s32 %v1131, 16
        %v1134 = vadd.s32 %v1131, 24
        %v1135 = vadd.s32 %v1131, 32
        %v1136 = vadd.s32 %v1131, 40
        %v1137 = vadd.s32 %v1131, 48
        %v1138 = vadd.s32 %v1131, 56
        %v1139 = vadd.s32 %v1131, 64
        %v1140 = vadd.s32 %v1131, 72
        %v1141 = vadd.s32 %v1131, 80
        %v1142 = vadd.s32 %v1131, 88
        %v1143 = vadd.s32 %v1131, 96
        %v1144 = vadd.s32 %v1131, 104
        %v1145 = vadd.s32 %v1131, 112
        %v1146 = vadd.s32 %v1131, 120
        %v1147 = vadd.s32 %v1131, %v816
        %v1148 = vadd.s32 %v1132, %v816
        %v1149 = vadd.s32 %v1133, %v816
        %v1150 = vadd.s32 %v1134, %v816
        %v1151 = vadd.s32 %v1135, %v816
        %v1152 = vadd.s32 %v1136, %v816
        %v1153 = vadd.s32 %v1137, %v816
        %v1154 = vadd.s32 %v1138, %v816
        %v1155 = vadd.s32 %v1139, %v816
        %v1156 = vadd.s32 %v1140, %v816
        %v1157 = vadd.s32 %v1141, %v816
        %v1158 = vadd.s32 %v1142, %v816
        %v1159 = vadd.s32 %v1143, %v816
        %v1160 = vadd.s32 %v1144, %v816
        %v1161 = vadd.s32 %v1145, %v816
        %v1162 = vadd.s32 %v1146, %v816
        %v1163 = vlaneseq
        %v1164 = vshrl.u32 %v1163, 7
        %v1165 = vsub.s32 0, %v1164
        %v1166 = vrot.slane %v813, %v1165
        %vm1167 = vcmp.eq.s32.totalorder %v1147, %v1166
        %vm1168 = vcmp.eq.s32.totalorder %v1148, %v1166
        %vm1169 = vcmp.eq.s32.totalorder %v1149, %v1166
        %vm1170 = vcmp.eq.s32.totalorder %v1150, %v1166
        %vm1171 = vcmp.eq.s32.totalorder %v1151, %v1166
        %vm1172 = vcmp.eq.s32.totalorder %v1152, %v1166
        %vm1173 = vcmp.eq.s32.totalorder %v1153, %v1166
        %vm1174 = vcmp.eq.s32.totalorder %v1154, %v1166
        %vm1175 = vcmp.eq.s32.totalorder %v1155, %v1166
        %vm1176 = vcmp.eq.s32.totalorder %v1156, %v1166
        %vm1177 = vcmp.eq.s32.totalorder %v1157, %v1166
        %vm1178 = vcmp.eq.s32.totalorder %v1158, %v1166
        %vm1179 = vcmp.eq.s32.totalorder %v1159, %v1166
        %vm1180 = vcmp.eq.s32.totalorder %v1160, %v1166
        %vm1181 = vcmp.eq.s32.totalorder %v1161, %v1166
        %vm1182 = vcmp.eq.s32.totalorder %v1162, %v1166
        %v1183 = vsel %vm1167, 1, 0
        %v1184 = vsel %vm1168, 1, 0
        %v1185 = vsel %vm1169, 1, 0
        %v1186 = vsel %vm1170, 1, 0
        %v1187 = vsel %vm1171, 1, 0
        %v1188 = vsel %vm1172, 1, 0
        %v1189 = vsel %vm1173, 1, 0
        %v1190 = vsel %vm1174, 1, 0
        %v1191 = vsel %vm1175, 1, 0
        %v1192 = vsel %vm1176, 1, 0
        %v1193 = vsel %vm1177, 1, 0
        %v1194 = vsel %vm1178, 1, 0
        %v1195 = vsel %vm1179, 1, 0
        %v1196 = vsel %vm1180, 1, 0
        %v1197 = vsel %vm1181, 1, 0
        %v1198 = vsel %vm1182, 1, 0
        %v1199 = vcvt.s32.f32 %v1183
        %v1200 = vcvt.s32.f32 %v1184
        %v1201 = vcvt.s32.f32 %v1185
        %v1202 = vcvt.s32.f32 %v1186
        %v1203 = vcvt.s32.f32 %v1187
        %v1204 = vcvt.s32.f32 %v1188
        %v1205 = vcvt.s32.f32 %v1189
        %v1206 = vcvt.s32.f32 %v1190
        %v1207 = vcvt.s32.f32 %v1191
        %v1208 = vcvt.s32.f32 %v1192
        %v1209 = vcvt.s32.f32 %v1193
        %v1210 = vcvt.s32.f32 %v1194
        %v1211 = vcvt.s32.f32 %v1195
        %v1212 = vcvt.s32.f32 %v1196
        %v1213 = vcvt.s32.f32 %v1197
        %v1214 = vcvt.s32.f32 %v1198
        %v1215 = vpack.c.bf16 %v1200, %v1199
        %v1216 = vpack.c.bf16 %v1202, %v1201
        %v1217 = vpack.c.bf16 %v1204, %v1203
        %v1218 = vpack.c.bf16 %v1206, %v1205
        %v1219 = vpack.c.bf16 %v1208, %v1207
        %v1220 = vpack.c.bf16 %v1210, %v1209
        %v1221 = vpack.c.bf16 %v1212, %v1211
        %v1222 = vpack.c.bf16 %v1214, %v1213
        %v1223 = vld [vmem:[#allocation12] sm:$0xff]
        %v1224 = vld [vmem:[#allocation12 + $0x8] sm:$0xff]
        %v1225 = vld [vmem:[#allocation12 + $0x10] sm:$0xff]
        %v1226 = vld [vmem:[#allocation12 + $0x18] sm:$0xff]
        %v1227 = vld [vmem:[#allocation12 + $0x20] sm:$0xff]
        %v1228 = vld [vmem:[#allocation12 + $0x28] sm:$0xff]
        %v1229 = vld [vmem:[#allocation12 + $0x30] sm:$0xff]
        %v1230 = vld [vmem:[#allocation12 + $0x38] sm:$0xff]
        %v1231 = vld [vmem:[#allocation12 + $0x40] sm:$0xff]
        %v1232 = vld [vmem:[#allocation12 + $0x48] sm:$0xff]
        %v1233 = vld [vmem:[#allocation12 + $0x50] sm:$0xff]
        %v1234 = vld [vmem:[#allocation12 + $0x58] sm:$0xff]
        %v1235 = vld [vmem:[#allocation12 + $0x60] sm:$0xff]
        %v1236 = vld [vmem:[#allocation12 + $0x68] sm:$0xff]
        %v1237 = vld [vmem:[#allocation12 + $0x70] sm:$0xff]
        %v1238 = vld [vmem:[#allocation12 + $0x78] sm:$0xff]
        %v1239 = vunpack.c.l.bf16 %v1215
        %v1240 = vunpack.c.h.bf16 %v1215
        %v1241 = vunpack.c.l.bf16 %v1216
        %v1242 = vunpack.c.h.bf16 %v1216
        %v1243 = vunpack.c.l.bf16 %v1217
        %v1244 = vunpack.c.h.bf16 %v1217
        %v1245 = vunpack.c.l.bf16 %v1218
        %v1246 = vunpack.c.h.bf16 %v1218
        %v1247 = vunpack.c.l.bf16 %v1219
        %v1248 = vunpack.c.h.bf16 %v1219
        %v1249 = vunpack.c.l.bf16 %v1220
        %v1250 = vunpack.c.h.bf16 %v1220
        %v1251 = vunpack.c.l.bf16 %v1221
        %v1252 = vunpack.c.h.bf16 %v1221
        %v1253 = vunpack.c.l.bf16 %v1222
        %v1254 = vunpack.c.h.bf16 %v1222
        %vm1255 = vcmask 130048
        %v1257 = vsel %vm1255, %v1239, 0
        %v1260 = vsel %vm1255, %v1240, 0
        %v1263 = vsel %vm1255, %v1241, 0
        %v1266 = vsel %vm1255, %v1242, 0
        %v1269 = vsel %vm1255, %v1243, 0
        %v1272 = vsel %vm1255, %v1244, 0
        %v1275 = vsel %vm1255, %v1245, 0
        %v1278 = vsel %vm1255, %v1246, 0
        %v1281 = vsel %vm1255, %v1247, 0
        %v1284 = vsel %vm1255, %v1248, 0
        %v1287 = vsel %vm1255, %v1249, 0
        %v1290 = vsel %vm1255, %v1250, 0
        %v1293 = vsel %vm1255, %v1251, 0
        %v1296 = vsel %vm1255, %v1252, 0
        %v1299 = vsel %vm1255, %v1253, 0
        %v1302 = vsel %vm1255, %v1254, 0
        %1304 = vmatprep.subr.mxu0 0.0
        %1305 = vmatpush1.msra.mxu0 0.0
        %1306 = vmatprep.subr.mxu0 0.0
        %1307 = vmatpush1.msra.mxu0 0.0
        %1308 = vmatprep.subr.mxu0 0.0
        %1309 = vmatpush1.msra.mxu0 0.0
        %1310 = vmatprep.subr.mxu0 0.0
        %1311 = vmatpush1.msra.mxu0 0.0
        %1312 = vmatprep.subr.mxu0 0.0
        %1313 = vmatpush1.msra.mxu0 0.0
        %1314 = vmatprep.subr.mxu0 0.0
        %1315 = vmatpush1.msra.mxu0 0.0
        %1316 = vmatprep.subr.mxu0 0.0
        %1317 = vmatpush1.msra.mxu0 0.0
        %1318 = vmatprep.subr.mxu0 0.0
        %1319 = vmatpush1.msra.mxu0 0.0
        %1320 = vmatprep.subr.mxu0 0.0
        %1321 = vmatpush1.msra.mxu0 0.0
        %1322 = vmatprep.subr.mxu0 0.0
        %1323 = vmatpush1.msra.mxu0 0.0
        %1324 = vmatprep.subr.mxu0 0.0
        %1325 = vmatpush1.msra.mxu0 0.0
        %1326 = vmatprep.subr.mxu0 0.0
        %1327 = vmatpush1.msra.mxu0 0.0
        %1328 = vmatprep.subr.mxu0 0.0
        %1329 = vmatpush1.msra.mxu0 0.0
        %1330 = vmatprep.subr.mxu0 0.0
        %1331 = vmatpush1.msra.mxu0 0.0
        %1332 = vmatprep.subr.mxu0 0.0
        %1333 = vmatpush1.msra.mxu0 %v1127
        %1334 = vmatprep.subr.mxu0 0.0
        %1335 = vmatpush1.msra.mxu0 %v1122
        %1336 = vmatprep.subr.mxu0 0.0
        %1337 = vmatpush2.msra.mxu0 0.0
        %1338 = vmatprep.subr.mxu0 0.0
        %1339 = vmatpush2.msra.mxu0 0.0
        %1340 = vmatprep.subr.mxu0 0.0
        %1341 = vmatpush2.msra.mxu0 0.0
        %1342 = vmatprep.subr.mxu0 0.0
        %1343 = vmatpush2.msra.mxu0 0.0
        %1344 = vmatprep.subr.mxu0 0.0
        %1345 = vmatpush2.msra.mxu0 0.0
        %1346 = vmatprep.subr.mxu0 0.0
        %1347 = vmatpush2.msra.mxu0 0.0
        %1348 = vmatprep.subr.mxu0 0.0
        %1349 = vmatpush2.msra.mxu0 0.0
        %1350 = vmatprep.subr.mxu0 0.0
        %1351 = vmatpush2.msra.mxu0 0.0
        %1352 = vmatprep.subr.mxu0 0.0
        %1353 = vmatpush2.msra.mxu0 0.0
        %1354 = vmatprep.subr.mxu0 0.0
        %1355 = vmatpush2.msra.mxu0 0.0
        %1356 = vmatprep.subr.mxu0 0.0
        %1357 = vmatpush2.msra.mxu0 0.0
        %1358 = vmatprep.subr.mxu0 0.0
        %1359 = vmatpush2.msra.mxu0 0.0
        %1360 = vmatprep.subr.mxu0 0.0
        %1361 = vmatpush2.msra.mxu0 0.0
        %1362 = vmatprep.subr.mxu0 0.0
        %1363 = vmatpush2.msra.mxu0 0.0
        %1364 = vmatprep.subr.mxu0 0.0
        %1365 = vmatpush2.msra.mxu0 0.0
        %1366 = vmatprep.subr.mxu0 0.0
        %1367 = vmatpush2.msra.mxu0 0.0
        %1368 = vmatprep.mubr.f32.mxu0 0.0
        %1369 = vmatmul.mubr.f32.gmra.mxu0 %v1257
        %v1370 = vpop.f32.mrf.mxu0
        %v1371 = vadd.f32 0.0, %v1370
        %v1372 = vpop.f32.mrf.mxu0
        %1373 = vmatprep.mubr.f32.mxu0 0.0
        %1374 = vmatmul.mubr.f32.gmra.mxu0 %v1260
        %v1375 = vpop.f32.mrf.mxu0
        %v1376 = vadd.f32 0.0, %v1375
        %v1377 = vpop.f32.mrf.mxu0
        %1378 = vmatprep.mubr.f32.mxu0 0.0
        %1379 = vmatmul.mubr.f32.gmra.mxu0 %v1263
        %v1380 = vpop.f32.mrf.mxu0
        %v1381 = vadd.f32 0.0, %v1380
        %v1382 = vpop.f32.mrf.mxu0
        %1383 = vmatprep.mubr.f32.mxu0 0.0
        %1384 = vmatmul.mubr.f32.gmra.mxu0 %v1266
        %v1385 = vpop.f32.mrf.mxu0
        %v1386 = vadd.f32 0.0, %v1385
        %v1387 = vpop.f32.mrf.mxu0
        %1388 = vmatprep.mubr.f32.mxu0 0.0
        %1389 = vmatmul.mubr.f32.gmra.mxu0 %v1269
        %v1390 = vpop.f32.mrf.mxu0
        %v1391 = vadd.f32 0.0, %v1390
        %v1392 = vpop.f32.mrf.mxu0
        %1393 = vmatprep.mubr.f32.mxu0 0.0
        %1394 = vmatmul.mubr.f32.gmra.mxu0 %v1272
        %v1395 = vpop.f32.mrf.mxu0
        %v1396 = vadd.f32 0.0, %v1395
        %v1397 = vpop.f32.mrf.mxu0
        %1398 = vmatprep.mubr.f32.mxu0 0.0
        %1399 = vmatmul.mubr.f32.gmra.mxu0 %v1275
        %v1400 = vpop.f32.mrf.mxu0
        %v1401 = vadd.f32 0.0, %v1400
        %v1402 = vpop.f32.mrf.mxu0
        %1403 = vmatprep.mubr.f32.mxu0 0.0
        %1404 = vmatmul.mubr.f32.gmra.mxu0 %v1278
        %v1405 = vpop.f32.mrf.mxu0
        %v1406 = vadd.f32 0.0, %v1405
        %v1407 = vpop.f32.mrf.mxu0
        %1408 = vmatprep.mubr.f32.mxu0 0.0
        %1409 = vmatmul.mubr.f32.gmra.mxu0 %v1281
        %v1410 = vpop.f32.mrf.mxu0
        %v1411 = vadd.f32 0.0, %v1410
        %v1412 = vpop.f32.mrf.mxu0
        %1413 = vmatprep.mubr.f32.mxu0 0.0
        %1414 = vmatmul.mubr.f32.gmra.mxu0 %v1284
        %v1415 = vpop.f32.mrf.mxu0
        %v1416 = vadd.f32 0.0, %v1415
        %v1417 = vpop.f32.mrf.mxu0
        %1418 = vmatprep.mubr.f32.mxu0 0.0
        %1419 = vmatmul.mubr.f32.gmra.mxu0 %v1287
        %v1420 = vpop.f32.mrf.mxu0
        %v1421 = vadd.f32 0.0, %v1420
        %v1422 = vpop.f32.mrf.mxu0
        %1423 = vmatprep.mubr.f32.mxu0 0.0
        %1424 = vmatmul.mubr.f32.gmra.mxu0 %v1290
        %v1425 = vpop.f32.mrf.mxu0
        %v1426 = vadd.f32 0.0, %v1425
        %v1427 = vpop.f32.mrf.mxu0
        %1428 = vmatprep.mubr.f32.mxu0 0.0
        %1429 = vmatmul.mubr.f32.gmra.mxu0 %v1293
        %v1430 = vpop.f32.mrf.mxu0
        %v1431 = vadd.f32 0.0, %v1430
        %v1432 = vpop.f32.mrf.mxu0
        %1433 = vmatprep.mubr.f32.mxu0 0.0
        %1434 = vmatmul.mubr.f32.gmra.mxu0 %v1296
        %v1435 = vpop.f32.mrf.mxu0
        %v1436 = vadd.f32 0.0, %v1435
        %v1437 = vpop.f32.mrf.mxu0
        %1438 = vmatprep.mubr.f32.mxu0 0.0
        %1439 = vmatmul.mubr.f32.gmra.mxu0 %v1299
        %v1440 = vpop.f32.mrf.mxu0
        %v1441 = vadd.f32 0.0, %v1440
        %v1442 = vpop.f32.mrf.mxu0
        %1443 = vmatprep.mubr.f32.mxu0 0.0
        %1444 = vmatmul.mubr.f32.gmra.mxu0 %v1302
        %v1445 = vpop.f32.mrf.mxu0
        %v1446 = vadd.f32 0.0, %v1445
        %v1447 = vpop.f32.mrf.mxu0
        %1448 = vdwg.mxu0
        %v1449 = vadd.f32 %v1223, %v1371
        %v1450 = vadd.f32 %v1224, %v1376
        %v1451 = vadd.f32 %v1225, %v1381
        %v1452 = vadd.f32 %v1226, %v1386
        %v1453 = vadd.f32 %v1227, %v1391
        %v1454 = vadd.f32 %v1228, %v1396
        %v1455 = vadd.f32 %v1229, %v1401
        %v1456 = vadd.f32 %v1230, %v1406
        %v1457 = vadd.f32 %v1231, %v1411
        %v1458 = vadd.f32 %v1232, %v1416
        %v1459 = vadd.f32 %v1233, %v1421
        %v1460 = vadd.f32 %v1234, %v1426
        %v1461 = vadd.f32 %v1235, %v1431
        %v1462 = vadd.f32 %v1236, %v1436
        %v1463 = vadd.f32 %v1237, %v1441
        %v1464 = vadd.f32 %v1238, %v1446
        %1465 = vst [vmem:[#allocation12] sm:$0xff] %v1449
        %1466 = vst [vmem:[#allocation12 + $0x8] sm:$0xff] %v1450
        %1467 = vst [vmem:[#allocation12 + $0x10] sm:$0xff] %v1451
        %1468 = vst [vmem:[#allocation12 + $0x18] sm:$0xff] %v1452
        %1469 = vst [vmem:[#allocation12 + $0x20] sm:$0xff] %v1453
        %1470 = vst [vmem:[#allocation12 + $0x28] sm:$0xff] %v1454
        %1471 = vst [vmem:[#allocation12 + $0x30] sm:$0xff] %v1455
        %1472 = vst [vmem:[#allocation12 + $0x38] sm:$0xff] %v1456
        %1473 = vst [vmem:[#allocation12 + $0x40] sm:$0xff] %v1457
        %1474 = vst [vmem:[#allocation12 + $0x48] sm:$0xff] %v1458
        %1475 = vst [vmem:[#allocation12 + $0x50] sm:$0xff] %v1459
        %1476 = vst [vmem:[#allocation12 + $0x58] sm:$0xff] %v1460
        %1477 = vst [vmem:[#allocation12 + $0x60] sm:$0xff] %v1461
        %1478 = vst [vmem:[#allocation12 + $0x68] sm:$0xff] %v1462
        %1479 = vst [vmem:[#allocation12 + $0x70] sm:$0xff] %v1463
        %1480 = vst [vmem:[#allocation12 + $0x78] sm:$0xff] %v1464
        %p1481 = scmp.eq.s32.totalorder %s24, 1
        // Predicated region
        $region77: #{tpu_custom_call.1} parent=55 // pred_check
          %p1482 = pneg %p1481
        $region78: #{tpu_custom_call.1} parent=55 // pred_check_branch
          %1484 = sbr.rel (%p1482) target = $region80
        $region79: #{tpu_custom_call.1} parent=55 // pred_region
          %v1485 = vld [vmem:[#allocation12] sm:$0xff]
          %v1486 = vld [vmem:[#allocation12 + $0x8] sm:$0xff]
          %v1487 = vld [vmem:[#allocation12 + $0x10] sm:$0xff]
          %v1488 = vld [vmem:[#allocation12 + $0x18] sm:$0xff]
          %v1489 = vld [vmem:[#allocation12 + $0x20] sm:$0xff]
          %v1490 = vld [vmem:[#allocation12 + $0x28] sm:$0xff]
          %v1491 = vld [vmem:[#allocation12 + $0x30] sm:$0xff]
          %v1492 = vld [vmem:[#allocation12 + $0x38] sm:$0xff]
          %v1493 = vld [vmem:[#allocation12 + $0x40] sm:$0xff]
          %v1494 = vld [vmem:[#allocation12 + $0x48] sm:$0xff]
          %v1495 = vld [vmem:[#allocation12 + $0x50] sm:$0xff]
          %v1496 = vld [vmem:[#allocation12 + $0x58] sm:$0xff]
          %v1497 = vld [vmem:[#allocation12 + $0x60] sm:$0xff]
          %v1498 = vld [vmem:[#allocation12 + $0x68] sm:$0xff]
          %v1499 = vld [vmem:[#allocation12 + $0x70] sm:$0xff]
          %v1500 = vld [vmem:[#allocation12 + $0x78] sm:$0xff]
          %v1501 = vmax.f32 %v1485, 0.0
          %v1502 = vmax.f32 %v1486, 0.0
          %v1503 = vmax.f32 %v1487, 0.0
          %v1504 = vmax.f32 %v1488, 0.0
          %v1505 = vmax.f32 %v1489, 0.0
          %v1506 = vmax.f32 %v1490, 0.0
          %v1507 = vmax.f32 %v1491, 0.0
          %v1508 = vmax.f32 %v1492, 0.0
          %v1509 = vmax.f32 %v1493, 0.0
          %v1510 = vmax.f32 %v1494, 0.0
          %v1511 = vmax.f32 %v1495, 0.0
          %v1512 = vmax.f32 %v1496, 0.0
          %v1513 = vmax.f32 %v1497, 0.0
          %v1514 = vmax.f32 %v1498, 0.0
          %v1515 = vmax.f32 %v1499, 0.0
          %v1516 = vmax.f32 %v1500, 0.0
          %1517 = vst [vmem:[#allocation12] sm:$0xff] %v1501
          %1518 = vst [vmem:[#allocation12 + $0x8] sm:$0xff] %v1502
          %1519 = vst [vmem:[#allocation12 + $0x10] sm:$0xff] %v1503
          %1520 = vst [vmem:[#allocation12 + $0x18] sm:$0xff] %v1504
          %1521 = vst [vmem:[#allocation12 + $0x20] sm:$0xff] %v1505
          %1522 = vst [vmem:[#allocation12 + $0x28] sm:$0xff] %v1506
          %1523 = vst [vmem:[#allocation12 + $0x30] sm:$0xff] %v1507
          %1524 = vst [vmem:[#allocation12 + $0x38] sm:$0xff] %v1508
          %1525 = vst [vmem:[#allocation12 + $0x40] sm:$0xff] %v1509
          %1526 = vst [vmem:[#allocation12 + $0x48] sm:$0xff] %v1510
          %1527 = vst [vmem:[#allocation12 + $0x50] sm:$0xff] %v1511
          %1528 = vst [vmem:[#allocation12 + $0x58] sm:$0xff] %v1512
          %1529 = vst [vmem:[#allocation12 + $0x60] sm:$0xff] %v1513
          %1530 = vst [vmem:[#allocation12 + $0x68] sm:$0xff] %v1514
          %1531 = vst [vmem:[#allocation12 + $0x70] sm:$0xff] %v1515
          %1532 = vst [vmem:[#allocation12 + $0x78] sm:$0xff] %v1516
        $region80: #{tpu_custom_call.1} parent=55 // pred_fallthru
          _
        // Predicated region
        $region81: #{tpu_custom_call.1} parent=55 // pred_check
          %p1533 = pneg %p241
        $region82: #{tpu_custom_call.1} parent=55 // pred_check_branch
          %1535 = sbr.rel (%p1533) target = $region84
        $region83: #{tpu_custom_call.1} parent=55 // pred_region
          %s1537 = ssub.s32 2048, 2048
          %1538 = vsyncadd [#allocation6], %s1537
          %s1539 = sshll.u32 [#allocation12], 4
          %s1540 = int_to_ptr.vmem [resolvable:$true] %s1539
          %1545 = dma.vmem_to_hbm [thread:$0]  %s1540, 2048, %s9, [#allocation6], 128, 128, 8
        $region84: #{tpu_custom_call.1} parent=55 // pred_fallthru
          _
        // Predicated region
        $region85: #{tpu_custom_call.1} parent=55 // pred_check
          %p1546 = pneg %p241
        $region86: #{tpu_custom_call.1} parent=55 // pred_check_branch
          %1548 = sbr.rel (%p1546) target = $region88
        $region87: #{tpu_custom_call.1} parent=55 // pred_region
          %1549 = dma.done [#allocation6], 2048
        $region88: #{tpu_custom_call.1} parent=55 // pred_fallthru
          _
      $region56: #{tpu_custom_call.1} parent=5 // pred_fallthru
        _
      %p1550 = scmp.le.s32.totalorder 2, %s19
      // Predicated region
      $region89: #{tpu_custom_call.1} parent=5 // pred_check
        %p1551 = pneg %p1550
      $region90: #{tpu_custom_call.1} parent=5 // pred_check_branch
        %1553 = sbr.rel (%p1551) target = $region92
      $region91: #{tpu_custom_call.1} parent=5 // pred_region
        %s1554 = ssub.s32 %s19, 2
      $region92: #{tpu_custom_call.1} parent=5 // pred_fallthru
        _
    $region6: #{tpu_custom_call.1} parent=1 // loop_footer
      %s23 = sadd.s32 1, %s19
    $region7: #{tpu_custom_call.1} parent=1 // loop_footer_branch
      %18 = sbr.rel target = $region3
    $region8: #{tpu_custom_call.1} parent=1 // loop_exit
      _
    %1555 = vsyncpa [#allocation5], 1
    %s1556 = scalar_lea.sflag [#allocation5], 1
    %1557 = vsyncpa %s1556, 1
    %1558 = vsyncpa [#allocation8], 1
    %1559 = vsyncpa [#allocation11], 1
    %1560 = vsyncpa [#allocation6], 1
    %s1561 = scalar_lea.sflag [#allocation6], 1
    %1562 = vsyncpa %s1561, 1

</llo_original>
